<compile_context>
chip_gen: v7x
topology: tpu7x:2x2x1
jax: 0.10.0
libtpu: 0.0.40
codegen_flags: <defaults>
</compile_context>

<pallas_src>
import functools

import numpy as np

import jax
import jax.numpy as jnp
from jax import lax
from jax.experimental import pallas as pl
from jax.experimental.pallas import tpu as pltpu


_VMEM_CAP = 32 * 1024 * 1024  # raises v5e's 16 MiB scoped default; fine on v6e/v7x


# --------------------------------------------------------------------------
# Fused Pallas kernel: conv stack + multi-task MLP head
# --------------------------------------------------------------------------
def _fused_forward_kernel(x_ref, *refs, n_conv):
    """One grid step = one batch tile; everything stays resident.

    x_ref : (tb, Cin*H*W)  bf16, torch-CHW-flattened input rows.
    refs  : n_conv x (W_full bf16 (Kin, Nout), b_full f32 (1, Nout)) conv pairs,
            then W1 (L, T*Hid) bf16, b1 (1, T*Hid) f32,
                 W2 (T*Hid, T*O) bf16 block-diagonal, b2 (1, T*O) f32,
            then the output ref (tb, T*O) f32.
    Matmuls use bf16 operands with f32 accumulation; bias+ReLU stay in f32.
    """
    *w_refs, o_ref = refs

    y = x_ref[...]                                     # bf16 activations
    k = 0
    for _ in range(n_conv):                            # conv + ReLU layers
        w, b = w_refs[k][...], w_refs[k + 1][...]
        k += 2
        acc = jnp.dot(y, w, preferred_element_type=jnp.float32)
        y = jnp.maximum(acc + b, 0.0).astype(w.dtype)  # f32 epilogue, bf16 out

    w1, b1 = w_refs[k][...], w_refs[k + 1][...]        # head layer 1 (all tasks)
    w2, b2 = w_refs[k + 2][...], w_refs[k + 3][...]    # head layer 2 (block-diag)
    h = jnp.dot(y, w1, preferred_element_type=jnp.float32)
    h = jnp.maximum(h + b1, 0.0).astype(w2.dtype)
    out = jnp.dot(h, w2, preferred_element_type=jnp.float32) + b2
    o_ref[...] = out.astype(o_ref.dtype)


def _nbytes(a):
    return int(a.size) * int(a.dtype.itemsize)


def fused_forward(x_flat, conv_ws, head_ws, *, true_flops, tile_b=64):
    """x_flat:(B, Cin*H*W) bf16 -> (B, T*O) f32, one pallas_call."""
    B, K0 = x_flat.shape
    W1, b1, W2, b2 = head_ws
    n_out = W2.shape[1]
    tb = B if B <= tile_b else tile_b
    grid = (pl.cdiv(B, tb),)

    operands = [x_flat]
    in_specs = [pl.BlockSpec((tb, K0), lambda i: (i, 0))]
    # Grid-invariant weights/biases: whole-array blocks with constant index
    # maps.  (On v7x one could single-buffer these with
    # pipeline_mode=pl.Buffered(1) to halve their VMEM; left out here since
    # total weight VMEM is ~2.5 MiB even double-buffered, far under the cap.)
    for w_full, b_full in conv_ws:
        operands += [w_full, b_full]
        in_specs += [pl.BlockSpec(w_full.shape, lambda i: (0, 0)),
                     pl.BlockSpec(b_full.shape, lambda i: (0, 0))]
    operands += [W1, b1, W2, b2]
    in_specs += [pl.BlockSpec(op.shape, lambda i: (0, 0))
                 for op in (W1, b1, W2, b2)]

    bytes_accessed = sum(_nbytes(op) for op in operands) + B * n_out * 4

    return pl.pallas_call(
        functools.partial(_fused_forward_kernel, n_conv=len(conv_ws)),
        out_shape=jax.ShapeDtypeStruct((B, n_out), jnp.float32),
        grid=grid,
        in_specs=in_specs,
        out_specs=pl.BlockSpec((tb, n_out), lambda i: (i, 0)),
        compiler_params=pltpu.CompilerParams(
            dimension_semantics=("parallel",),
            vmem_limit_bytes=_VMEM_CAP),
        cost_estimate=pl.CostEstimate(          # true arithmetic, not inflated
            flops=int(true_flops),
            transcendentals=0,
            bytes_accessed=int(bytes_accessed)),
    )(*operands)


# --------------------------------------------------------------------------
# Parameter init (PyTorch-equivalent weights, rearranged once for the kernel)
# --------------------------------------------------------------------------
def _unrolled_conv_weight(w_pt, b_pt, h_in, w_in):
    """Fold a 3x3/stride-2/pad-1 conv (torch OIHW weight) into one dense matmul.

    Returns (W_full, b_full, (h_out, w_out)) with
      W_full : (Cin*Hin*Win, Cout*Hout*Wout)  CHW flatten order on both sides
      b_full : (1, Cout*Hout*Wout)            float32
    so that  relu(x_chw_flat @ W_full + b_full) == relu(conv2d(x)) CHW-flattened.
    Zero padding is encoded by omitting out-of-range taps (zero rows).
    """
    w = np.asarray(w_pt, np.float32)
    b = np.asarray(b_pt, np.float32)
    c_out, c_in = w.shape[0], w.shape[1]
    h_out, w_out = (h_in - 1) // 2 + 1, (w_in - 1) // 2 + 1
    W_full = np.zeros((c_in * h_in * w_in, c_out * h_out * w_out), np.float32)
    rows_c1 = np.arange(c_in) * (h_in * w_in)
    cols_c2 = np.arange(c_out) * (h_out * w_out)
    for di in range(3):
        for dj in range(3):
            tap = w[:, :, di, dj].T                          # (Cin, Cout)
            for i2 in range(h_out):
                i1 = 2 * i2 + di - 1
                if not 0 <= i1 < h_in:
                    continue
                for j2 in range(w_out):
                    j1 = 2 * j2 + dj - 1
                    if not 0 <= j1 < w_in:
                        continue
                    W_full[np.ix_(rows_c1 + i1 * w_in + j1,
                                  cols_c2 + i2 * w_out + j2)] += tap
    b_full = np.repeat(b, h_out * w_out)[None, :]
    return W_full, b_full, (h_out, w_out)


def init_params(key, n_tasks, in_ch, conv_layers, latent_rep_dim,
                hidden_dim, output_dim, H, W):
    channels = [in_ch] + list(conv_layers) + [latent_rep_dim]
    conv_ref, conv_kernel, conv_meta = [], [], []
    h, w = H, W
    for cin, cout in zip(channels[:-1], channels[1:]):
        key, kw_, kb_ = jax.random.split(key, 3)
        w_pt = 0.1 * jax.random.normal(kw_, (cout, cin, 3, 3), jnp.float32)
        b_pt = 0.1 * jax.random.normal(kb_, (cout,), jnp.float32)
        conv_ref.append((w_pt, b_pt))
        W_full, b_full, (ho, wo) = _unrolled_conv_weight(w_pt, b_pt, h, w)
        conv_kernel.append((jnp.asarray(W_full, jnp.bfloat16),   # MXU operand
                            jnp.asarray(b_full, jnp.float32)))   # f32 epilogue
        conv_meta.append((h, w, cin, cout, ho, wo))
        h, w = ho, wo

    latent = latent_rep_dim * h * w          # == torch Flatten size (CHW order)

    key, k1, k2, k3, k4 = jax.random.split(key, 5)
    W1_pt = 0.1 * jax.random.normal(k1, (n_tasks, latent, hidden_dim), jnp.float32)
    b1_pt = 0.1 * jax.random.normal(k2, (n_tasks, hidden_dim), jnp.float32)
    W2_pt = 0.1 * jax.random.normal(k3, (n_tasks, hidden_dim, output_dim), jnp.float32)
    b2_pt = 0.1 * jax.random.normal(k4, (n_tasks, output_dim), jnp.float32)

    # Head layer 1: tasks folded into N -> (L, T*Hid).  The conv output is
    # already in torch CHW flatten order, so W1 needs no row permutation.
    W1_wide = jnp.asarray(
        np.transpose(np.asarray(W1_pt), (1, 0, 2)).reshape(latent, n_tasks * hidden_dim),
        jnp.bfloat16)
    b1_wide = jnp.asarray(np.asarray(b1_pt).reshape(1, n_tasks * hidden_dim),
                          jnp.float32)
    # Head layer 2: block-diagonal (T*Hid, T*O) -> one lane-dense dot for all tasks.
    W2_np = np.asarray(W2_pt)
    W2_blk = np.zeros((n_tasks * hidden_dim, n_tasks * output_dim), np.float32)
    for t in range(n_tasks):
        W2_blk[t * hidden_dim:(t + 1) * hidden_dim,
               t * output_dim:(t + 1) * output_dim] = W2_np[t]
    W2_blk = jnp.asarray(W2_blk, jnp.bfloat16)
    b2_flat = jnp.asarray(np.asarray(b2_pt).reshape(1, n_tasks * output_dim),
                          jnp.float32)

    meta = dict(conv=conv_meta, latent=latent, hidden=hidden_dim,
                out=output_dim, n_tasks=n_tasks)
    ref = (conv_ref, (W1_pt, b1_pt, W2_pt, b2_pt))
    return {"conv": conv_kernel,
            "head": (W1_wide, b1_wide, W2_blk, b2_flat),
            "meta": meta,
            "ref": ref}


# --------------------------------------------------------------------------
# Forward pass (== ConvMultiOutputNet.forward)
# --------------------------------------------------------------------------
def conv_multi_output_net(params, x_nchw, task_id=None, *, tile_b=64):
    meta = params["meta"]
    T, Hid, O = meta["n_tasks"], meta["hidden"], meta["out"]
    B = x_nchw.shape[0]

    # torch NCHW input -> per-example CHW-flattened rows (the conv weights were
    # built in the same order); this reshape+cast is the only wrapper-side op.
    x_flat = x_nchw.reshape(B, -1).astype(jnp.bfloat16)

    W1, b1, W2, b2 = params["head"]
    t_eff = T
    if task_id is not None:                             # single-task head slice
        t_eff = 1
        W1 = W1[:, task_id * Hid:(task_id + 1) * Hid]
        b1 = b1[:, task_id * Hid:(task_id + 1) * Hid]
        W2 = W2[task_id * Hid:(task_id + 1) * Hid, task_id * O:(task_id + 1) * O]
        b2 = b2[:, task_id * O:(task_id + 1) * O]

    # True arithmetic for the cost hint (not the unrolled-weight matmul flops).
    flops = 0
    for (hi, wi, ci, co, ho, wo) in meta["conv"]:
        flops += 2 * B * ho * wo * 9 * ci * co
    flops += 2 * B * meta["latent"] * Hid * t_eff + 2 * B * Hid * O * t_eff

    out = fused_forward(x_flat, params["conv"], (W1, b1, W2, b2),
                        true_flops=flops, tile_b=tile_b)
    if task_id is not None:
        return out                                      # (B, output_dim)
    # torch.stack(dim=-1): (B, output_dim, n_tasks)
    return out.reshape(B, T, O).transpose(0, 2, 1)


# --------------------------------------------------------------------------
# Pure-JAX (XLA) reference of the PyTorch module, for correctness checking
# --------------------------------------------------------------------------
def _reference_forward(ref_params, x_nchw, task_id):
    conv_pt, (W1_pt, b1_pt, W2_pt, b2_pt) = ref_params
    with jax.default_matmul_precision("highest"):
        y = x_nchw
        for w_pt, b in conv_pt:
            y = lax.conv_general_dilated(
                y, w_pt, window_strides=(2, 2), padding=((1, 1), (1, 1)),
                dimension_numbers=("NCHW", "OIHW", "NCHW"))
            y = jnp.maximum(y + b.reshape(1, -1, 1, 1), 0.0)
        e = y.reshape(y.shape[0], -1)                   # torch nn.Flatten: CHW

        def mlp(t):
            h = jnp.maximum(e @ W1_pt[t] + b1_pt[t], 0.0)
            return h @ W2_pt[t] + b2_pt[t]

        if task_id is not None:
            return mlp(task_id)
        return jnp.stack([mlp(t) for t in range(W1_pt.shape[0])], axis=-1)


# --------------------------------------------------------------------------
if __name__ == "__main__":
    key = jax.random.PRNGKey(0)
    k_x, k_p = jax.random.split(key)

    # small shapes consistent with the module
    B, C_in, H, W = 2, 4, 16, 16
    n_tasks, conv_layers, latent_rep_dim = 3, [8], 8
    hidden_dim, output_dim = 32, 6

    x = jax.random.normal(k_x, (B, C_in, H, W), jnp.float32)
    params = init_params(k_p, n_tasks, C_in, conv_layers, latent_rep_dim,
                         hidden_dim, output_dim, H, W)

    y_all = jax.block_until_ready(conv_multi_output_net(params, x))
    y_one = jax.block_until_ready(conv_multi_output_net(params, x, task_id=1))

    assert y_all.shape == (B, output_dim, n_tasks), y_all.shape
    assert y_one.shape == (B, output_dim), y_one.shape
    # task_id path must agree with the stacked path (same bf16 MXU arithmetic)
    assert jnp.allclose(y_all[..., 1], y_one, atol=1e-3), \
        float(jnp.max(jnp.abs(y_all[..., 1] - y_one)))

    # cross-check the Pallas path against a pure-JAX f32 reference of the module
    # (bf16 MXU operands -> loosened tolerances, ~1e-2 relative expected)
    ref_all = _reference_forward(params["ref"], x, None)
    ref_one = _reference_forward(params["ref"], x, 1)
    assert jnp.allclose(y_all, ref_all, atol=3e-2, rtol=5e-2), \
        float(jnp.max(jnp.abs(y_all - ref_all)))
    assert jnp.allclose(y_one, ref_one, atol=3e-2, rtol=5e-2), \
        float(jnp.max(jnp.abs(y_one - ref_one)))

    print("KERNEL_OK")
</pallas_src>

<mosaic_0001>
module attributes {stable_mosaic.version = 11 : i64} {
  func.func @_fused_forward_kernel(%arg0: i32, %arg1: memref<2x1024xbf16, #tpu.memory_space<vmem>>, %arg2: memref<1024x512xbf16, #tpu.memory_space<vmem>>, %arg3: memref<1x512xf32, #tpu.memory_space<vmem>>, %arg4: memref<512x128xbf16, #tpu.memory_space<vmem>>, %arg5: memref<1x128xf32, #tpu.memory_space<vmem>>, %arg6: memref<128x96xbf16, #tpu.memory_space<vmem>>, %arg7: memref<1x96xf32, #tpu.memory_space<vmem>>, %arg8: memref<96x18xbf16, #tpu.memory_space<vmem>>, %arg9: memref<1x18xf32, #tpu.memory_space<vmem>>, %arg10: memref<2x18xf32, #tpu.memory_space<vmem>>) attributes {dimension_semantics = [#tpu.dimension_semantics<parallel>], iteration_bounds = array<i64: 1>, scalar_prefetch = 0 : i64, scratch_operands = 0 : i64, tpu.core_type = #tpu.core_type<tc>, window_params = [{transform_indices = @transform_0, window_bounds = array<i64: 2, 1024>}, {pipeline_mode = #tpu.pipeline_mode<synchronous>, transform_indices = @transform_1, window_bounds = array<i64: 1024, 512>}, {pipeline_mode = #tpu.pipeline_mode<synchronous>, transform_indices = @transform_2, window_bounds = array<i64: 1, 512>}, {pipeline_mode = #tpu.pipeline_mode<synchronous>, transform_indices = @transform_3, window_bounds = array<i64: 512, 128>}, {pipeline_mode = #tpu.pipeline_mode<synchronous>, transform_indices = @transform_4, window_bounds = array<i64: 1, 128>}, {pipeline_mode = #tpu.pipeline_mode<synchronous>, transform_indices = @transform_5, window_bounds = array<i64: 128, 96>}, {pipeline_mode = #tpu.pipeline_mode<synchronous>, transform_indices = @transform_6, window_bounds = array<i64: 1, 96>}, {pipeline_mode = #tpu.pipeline_mode<synchronous>, transform_indices = @transform_7, window_bounds = array<i64: 96, 18>}, {pipeline_mode = #tpu.pipeline_mode<synchronous>, transform_indices = @transform_8, window_bounds = array<i64: 1, 18>}, {transform_indices = @transform_9, window_bounds = array<i64: 2, 18>}]} {
    %c0 = arith.constant 0 : index
    %c0_0 = arith.constant 0 : index
    %0 = vector.load %arg1[%c0, %c0_0] : memref<2x1024xbf16, #tpu.memory_space<vmem>>, vector<2x1024xbf16>
    %c0_1 = arith.constant 0 : index
    %c0_2 = arith.constant 0 : index
    %1 = vector.load %arg2[%c0_1, %c0_2] : memref<1024x512xbf16, #tpu.memory_space<vmem>>, vector<1024x512xbf16>
    %c0_3 = arith.constant 0 : index
    %c0_4 = arith.constant 0 : index
    %2 = vector.load %arg3[%c0_3, %c0_4] : memref<1x512xf32, #tpu.memory_space<vmem>>, vector<1x512xf32>
    %cst = arith.constant dense<0.000000e+00> : vector<2x512xf32>
    %3 = tpu.matmul %0, %1, %cst {dimension_numbers = #tpu.dot_dimension_numbers<[1], [0], [0], [1], [0, 0, 1, 1], [], []>} : vector<2x1024xbf16>, vector<1024x512xbf16>, vector<2x512xf32> -> vector<2x512xf32>
    %4 = vector.broadcast %2 : vector<1x512xf32> to vector<2x512xf32>
    %5 = arith.addf %3, %4 : vector<2x512xf32>
    %cst_5 = arith.constant 0.000000e+00 : f32
    %6 = vector.broadcast %cst_5 : f32 to vector<2x512xf32>
    %7 = arith.maximumf %5, %6 : vector<2x512xf32>
    %8 = arith.truncf %7 : vector<2x512xf32> to vector<2x512xbf16>
    %c0_6 = arith.constant 0 : index
    %c0_7 = arith.constant 0 : index
    %9 = vector.load %arg4[%c0_6, %c0_7] : memref<512x128xbf16, #tpu.memory_space<vmem>>, vector<512x128xbf16>
    %c0_8 = arith.constant 0 : index
    %c0_9 = arith.constant 0 : index
    %10 = vector.load %arg5[%c0_8, %c0_9] : memref<1x128xf32, #tpu.memory_space<vmem>>, vector<1x128xf32>
    %cst_10 = arith.constant dense<0.000000e+00> : vector<2x128xf32>
    %11 = tpu.matmul %8, %9, %cst_10 {dimension_numbers = #tpu.dot_dimension_numbers<[1], [0], [0], [1], [0, 0, 1, 1], [], []>} : vector<2x512xbf16>, vector<512x128xbf16>, vector<2x128xf32> -> vector<2x128xf32>
    %12 = vector.broadcast %10 : vector<1x128xf32> to vector<2x128xf32>
    %13 = arith.addf %11, %12 : vector<2x128xf32>
    %cst_11 = arith.constant 0.000000e+00 : f32
    %14 = vector.broadcast %cst_11 : f32 to vector<2x128xf32>
    %15 = arith.maximumf %13, %14 : vector<2x128xf32>
    %16 = arith.truncf %15 : vector<2x128xf32> to vector<2x128xbf16>
    %c0_12 = arith.constant 0 : index
    %c0_13 = arith.constant 0 : index
    %17 = vector.load %arg6[%c0_12, %c0_13] : memref<128x96xbf16, #tpu.memory_space<vmem>>, vector<128x96xbf16>
    %c0_14 = arith.constant 0 : index
    %c0_15 = arith.constant 0 : index
    %18 = vector.load %arg7[%c0_14, %c0_15] : memref<1x96xf32, #tpu.memory_space<vmem>>, vector<1x96xf32>
    %c0_16 = arith.constant 0 : index
    %c0_17 = arith.constant 0 : index
    %19 = vector.load %arg8[%c0_16, %c0_17] : memref<96x18xbf16, #tpu.memory_space<vmem>>, vector<96x18xbf16>
    %c0_18 = arith.constant 0 : index
    %c0_19 = arith.constant 0 : index
    %20 = vector.load %arg9[%c0_18, %c0_19] : memref<1x18xf32, #tpu.memory_space<vmem>>, vector<1x18xf32>
    %cst_20 = arith.constant dense<0.000000e+00> : vector<2x96xf32>
    %21 = tpu.matmul %16, %17, %cst_20 {dimension_numbers = #tpu.dot_dimension_numbers<[1], [0], [0], [1], [0, 0, 1, 1], [], []>} : vector<2x128xbf16>, vector<128x96xbf16>, vector<2x96xf32> -> vector<2x96xf32>
    %22 = vector.broadcast %18 : vector<1x96xf32> to vector<2x96xf32>
    %23 = arith.addf %21, %22 : vector<2x96xf32>
    %cst_21 = arith.constant 0.000000e+00 : f32
    %24 = vector.broadcast %cst_21 : f32 to vector<2x96xf32>
    %25 = arith.maximumf %23, %24 : vector<2x96xf32>
    %26 = arith.truncf %25 : vector<2x96xf32> to vector<2x96xbf16>
    %cst_22 = arith.constant dense<0.000000e+00> : vector<2x18xf32>
    %27 = tpu.matmul %26, %19, %cst_22 {dimension_numbers = #tpu.dot_dimension_numbers<[1], [0], [0], [1], [0, 0, 1, 1], [], []>} : vector<2x96xbf16>, vector<96x18xbf16>, vector<2x18xf32> -> vector<2x18xf32>
    %28 = vector.broadcast %20 : vector<1x18xf32> to vector<2x18xf32>
    %29 = arith.addf %27, %28 : vector<2x18xf32>
    %c0_23 = arith.constant 0 : index
    %c0_24 = arith.constant 0 : index
    %30 = vector.load %arg10[%c0_23, %c0_24] : memref<2x18xf32, #tpu.memory_space<vmem>>, vector<2x18xf32>
    tpu.vector_store %arg10[%c0_23, %c0_24], %29 {strides = array<i32>} : memref<2x18xf32, #tpu.memory_space<vmem>>, vector<2x18xf32>,
    return
  }
  func.func @transform_0(%arg0: i32) -> (i32, i32) {
    %c0_i32 = arith.constant 0 : i32
    %c0_i32_0 = arith.constant 0 : i32
    return %arg0, %c0_i32 : i32, i32
  }
  func.func @transform_1(%arg0: i32) -> (i32, i32) {
    %c0_i32 = arith.constant 0 : i32
    %c0_i32_0 = arith.constant 0 : i32
    %c0_i32_1 = arith.constant 0 : i32
    return %c0_i32, %c0_i32_0 : i32, i32
  }
  func.func @transform_2(%arg0: i32) -> (i32, i32) {
    %c0_i32 = arith.constant 0 : i32
    %c0_i32_0 = arith.constant 0 : i32
    %c0_i32_1 = arith.constant 0 : i32
    return %c0_i32, %c0_i32_0 : i32, i32
  }
  func.func @transform_3(%arg0: i32) -> (i32, i32) {
    %c0_i32 = arith.constant 0 : i32
    %c0_i32_0 = arith.constant 0 : i32
    %c0_i32_1 = arith.constant 0 : i32
    return %c0_i32, %c0_i32_0 : i32, i32
  }
  func.func @transform_4(%arg0: i32) -> (i32, i32) {
    %c0_i32 = arith.constant 0 : i32
    %c0_i32_0 = arith.constant 0 : i32
    %c0_i32_1 = arith.constant 0 : i32
    return %c0_i32, %c0_i32_0 : i32, i32
  }
  func.func @transform_5(%arg0: i32) -> (i32, i32) {
    %c0_i32 = arith.constant 0 : i32
    %c0_i32_0 = arith.constant 0 : i32
    %c0_i32_1 = arith.constant 0 : i32
    return %c0_i32, %c0_i32_0 : i32, i32
  }
  func.func @transform_6(%arg0: i32) -> (i32, i32) {
    %c0_i32 = arith.constant 0 : i32
    %c0_i32_0 = arith.constant 0 : i32
    %c0_i32_1 = arith.constant 0 : i32
    return %c0_i32, %c0_i32_0 : i32, i32
  }
  func.func @transform_7(%arg0: i32) -> (i32, i32) {
    %c0_i32 = arith.constant 0 : i32
    %c0_i32_0 = arith.constant 0 : i32
    %c0_i32_1 = arith.constant 0 : i32
    return %c0_i32, %c0_i32_0 : i32, i32
  }
  func.func @transform_8(%arg0: i32) -> (i32, i32) {
    %c0_i32 = arith.constant 0 : i32
    %c0_i32_0 = arith.constant 0 : i32
    %c0_i32_1 = arith.constant 0 : i32
    return %c0_i32, %c0_i32_0 : i32, i32
  }
  func.func @transform_9(%arg0: i32) -> (i32, i32) {
    %c0_i32 = arith.constant 0 : i32
    %c0_i32_0 = arith.constant 0 : i32
    return %arg0, %c0_i32 : i32, i32
  }
}

</mosaic_0001>

<llo_original>
// kernel: tpu_custom_call.1
$region0: #{tpu_custom_call.1}
  #allocation0 [shape = 'u32[]', space=smem, size = 0x4, offset = 0x4, fixed_abs, tag = 'smem constant byte address 0x4 - core index']
  #allocation1 [shape = 'u32[144,128]{1,0:T(1,128)}', space=vmem, size = 0x12000, scoped, tag = 'internal scratch']
  %s0 = inlined_call_operand.vmem [shape: bf16[2,1024], index: 0, kind: input, shape index: {}]
  %s1 = inlined_call_operand.hbm [shape: bf16[1024,512], index: 1, kind: input, shape index: {}]
  %s2 = inlined_call_operand.vmem [shape: f32[1,512], index: 2, kind: input, shape index: {}]
  %s3 = inlined_call_operand.hbm [shape: bf16[512,128], index: 3, kind: input, shape index: {}]
  %s4 = inlined_call_operand.vmem [shape: f32[1,128], index: 4, kind: input, shape index: {}]
  %s5 = inlined_call_operand.vmem [shape: bf16[128,96], index: 5, kind: input, shape index: {}]
  %s6 = inlined_call_operand.vmem [shape: f32[1,96], index: 6, kind: input, shape index: {}]
  %s7 = inlined_call_operand.vmem [shape: bf16[96,18], index: 7, kind: input, shape index: {}]
  %s8 = inlined_call_operand.vmem [shape: f32[1,18], index: 8, kind: input, shape index: {}]
  %s9 = inlined_call_operand.hbm [shape: f32[2,18], index: 9, kind: output, shape index: {}]
  %s10 = sld [smem:[#allocation0]]
  $region54: #{tpu_custom_call.1} parent=0
    _
  %s12 = ssub.s32 1, %s10
  %s13 = scalar_select 0, %s12, %s10
  $region1: #{tpu_custom_call.1} parent=0
    #allocation2 [shape = 'u8[1048576]{0}', space=vmem, size = 0x100000, scoped, tag = 'input window, operand 1, single buffered']
    #allocation3 [shape = 's32[1]{0}', space=sflag, size = 0x4, scoped, tag = 'scoped memory for tpu_custom_call.1']
    #allocation4 [shape = 's32[1]{0}', space=sflag, size = 0x4, scoped, tag = 'scoped memory for tpu_custom_call.1']
    #allocation5 [shape = 'u8[131072]{0}', space=vmem, size = 0x20000, scoped, tag = 'input window, operand 3, single buffered']
    #allocation6 [shape = 's32[1]{0}', space=sflag, size = 0x4, scoped, tag = 'scoped memory for tpu_custom_call.1']
    #allocation7 [shape = 'u8[1024]{0}', space=vmem, size = 0x400, scoped, tag = 'output window, operand 0, single buffered']
    %14 = vsyncpa [#allocation3], 0
    %15 = vsyncpa [#allocation6], 0
    %16 = vsyncpa [#allocation4], 0
    // Predicated region
    $region2: #{tpu_custom_call.1} parent=1 // pred_check
      _
    $region3: #{tpu_custom_call.1} parent=1 // pred_check_branch
      %18 = sbr.rel (0) target = $region5
    $region4: #{tpu_custom_call.1} parent=1 // pred_region
      _
    $region5: #{tpu_custom_call.1} parent=1 // pred_fallthru
      _
    // Predicated region
    $region6: #{tpu_custom_call.1} parent=1 // pred_check
      _
    $region7: #{tpu_custom_call.1} parent=1 // pred_check_branch
      %20 = sbr.rel (0) target = $region9
    $region8: #{tpu_custom_call.1} parent=1 // pred_region
      %s22 = ssub.s32 32768, 32768
      %23 = vsyncadd [#allocation3], %s22
      %s24 = sshll.u32 [#allocation2], 4
      %s25 = int_to_ptr.vmem [resolvable:$true] %s24
      %30 = dma.hbm_to_vmem [thread:$0]  %s1, 32768, %s25, [#allocation3], 256, 256, 16
    $region9: #{tpu_custom_call.1} parent=1 // pred_fallthru
      _
    // Predicated region
    $region10: #{tpu_custom_call.1} parent=1 // pred_check
      _
    $region11: #{tpu_custom_call.1} parent=1 // pred_check_branch
      %32 = sbr.rel (0) target = $region13
    $region12: #{tpu_custom_call.1} parent=1 // pred_region
      _
    $region13: #{tpu_custom_call.1} parent=1 // pred_fallthru
      _
    // Predicated region
    $region14: #{tpu_custom_call.1} parent=1 // pred_check
      _
    $region15: #{tpu_custom_call.1} parent=1 // pred_check_branch
      %34 = sbr.rel (0) target = $region17
    $region16: #{tpu_custom_call.1} parent=1 // pred_region
      %s36 = ssub.s32 4096, 4096
      %37 = vsyncadd [#allocation6], %s36
      %s38 = sshll.u32 [#allocation5], 4
      %s39 = int_to_ptr.vmem [resolvable:$true] %s38
      %44 = dma.hbm_to_vmem [thread:$0]  %s3, 4096, %s39, [#allocation6], 64, 64, 4
    $region17: #{tpu_custom_call.1} parent=1 // pred_fallthru
      _
    // Predicated region
    $region18: #{tpu_custom_call.1} parent=1 // pred_check
      _
    $region19: #{tpu_custom_call.1} parent=1 // pred_check_branch
      %46 = sbr.rel (0) target = $region21
    $region20: #{tpu_custom_call.1} parent=1 // pred_region
      _
    $region21: #{tpu_custom_call.1} parent=1 // pred_fallthru
      _
    // Predicated region
    $region22: #{tpu_custom_call.1} parent=1 // pred_check
      _
    $region23: #{tpu_custom_call.1} parent=1 // pred_check_branch
      %48 = sbr.rel (0) target = $region25
    $region24: #{tpu_custom_call.1} parent=1 // pred_region
      _
    $region25: #{tpu_custom_call.1} parent=1 // pred_fallthru
      _
    // Predicated region
    $region26: #{tpu_custom_call.1} parent=1 // pred_check
      _
    $region27: #{tpu_custom_call.1} parent=1 // pred_check_branch
      %50 = sbr.rel (0) target = $region29
    $region28: #{tpu_custom_call.1} parent=1 // pred_region
      _
    $region29: #{tpu_custom_call.1} parent=1 // pred_fallthru
      _
    // Predicated region
    $region30: #{tpu_custom_call.1} parent=1 // pred_check
      _
    $region31: #{tpu_custom_call.1} parent=1 // pred_check_branch
      %52 = sbr.rel (0) target = $region33
    $region32: #{tpu_custom_call.1} parent=1 // pred_region
      _
    $region33: #{tpu_custom_call.1} parent=1 // pred_fallthru
      _
    // Predicated region
    $region34: #{tpu_custom_call.1} parent=1 // pred_check
      _
    $region35: #{tpu_custom_call.1} parent=1 // pred_check_branch
      %54 = sbr.rel (0) target = $region37
    $region36: #{tpu_custom_call.1} parent=1 // pred_region
      _
    $region37: #{tpu_custom_call.1} parent=1 // pred_fallthru
      _
    // Predicated region
    $region38: #{tpu_custom_call.1} parent=1 // pred_check
      _
    $region39: #{tpu_custom_call.1} parent=1 // pred_check_branch
      %56 = sbr.rel (0) target = $region41
    $region40: #{tpu_custom_call.1} parent=1 // pred_region
      %57 = dma.done [#allocation3], 32768
    $region41: #{tpu_custom_call.1} parent=1 // pred_fallthru
      _
    // Predicated region
    $region42: #{tpu_custom_call.1} parent=1 // pred_check
      _
    $region43: #{tpu_custom_call.1} parent=1 // pred_check_branch
      %59 = sbr.rel (0) target = $region45
    $region44: #{tpu_custom_call.1} parent=1 // pred_region
      %60 = dma.done [#allocation6], 4096
    $region45: #{tpu_custom_call.1} parent=1 // pred_fallthru
      _
    %v62 = vld [vmem:[%s0] sm:$0xff]
    %v63 = vld [vmem:[#allocation2] sm:$0xff]
    %v64 = vld [vmem:[#allocation2 + $0x8] sm:$0xff]
    %v65 = vld [vmem:[#allocation2 + $0x10] sm:$0xff]
    %v66 = vld [vmem:[#allocation2 + $0x18] sm:$0xff]
    %v67 = vld [vmem:[#allocation2 + $0x20] sm:$0xff]
    %v68 = vld [vmem:[#allocation2 + $0x28] sm:$0xff]
    %v69 = vld [vmem:[#allocation2 + $0x30] sm:$0xff]
    %v70 = vld [vmem:[#allocation2 + $0x38] sm:$0xff]
    %v71 = vld [vmem:[#allocation2 + $0x40] sm:$0xff]
    %v72 = vld [vmem:[#allocation2 + $0x48] sm:$0xff]
    %v73 = vld [vmem:[#allocation2 + $0x50] sm:$0xff]
    %v74 = vld [vmem:[#allocation2 + $0x58] sm:$0xff]
    %v75 = vld [vmem:[#allocation2 + $0x60] sm:$0xff]
    %v76 = vld [vmem:[#allocation2 + $0x68] sm:$0xff]
    %v77 = vld [vmem:[#allocation2 + $0x70] sm:$0xff]
    %v78 = vld [vmem:[#allocation2 + $0x78] sm:$0xff]
    %v79 = vld [vmem:[#allocation2 + $0x80] sm:$0xff]
    %v80 = vld [vmem:[#allocation2 + $0x88] sm:$0xff]
    %v81 = vld [vmem:[#allocation2 + $0x90] sm:$0xff]
    %v82 = vld [vmem:[#allocation2 + $0x98] sm:$0xff]
    %v83 = vld [vmem:[#allocation2 + $0xa0] sm:$0xff]
    %v84 = vld [vmem:[#allocation2 + $0xa8] sm:$0xff]
    %v85 = vld [vmem:[#allocation2 + $0xb0] sm:$0xff]
    %v86 = vld [vmem:[#allocation2 + $0xb8] sm:$0xff]
    %v87 = vld [vmem:[#allocation2 + $0xc0] sm:$0xff]
    %v88 = vld [vmem:[#allocation2 + $0xc8] sm:$0xff]
    %v89 = vld [vmem:[#allocation2 + $0xd0] sm:$0xff]
    %v90 = vld [vmem:[#allocation2 + $0xd8] sm:$0xff]
    %v91 = vld [vmem:[#allocation2 + $0xe0] sm:$0xff]
    %v92 = vld [vmem:[#allocation2 + $0xe8] sm:$0xff]
    %v93 = vld [vmem:[#allocation2 + $0xf0] sm:$0xff]
    %v94 = vld [vmem:[#allocation2 + $0xf8] sm:$0xff]
    %v95 = vld [vmem:[#allocation2 + $0x100] sm:$0xff]
    %v96 = vld [vmem:[#allocation2 + $0x108] sm:$0xff]
    %v97 = vld [vmem:[#allocation2 + $0x110] sm:$0xff]
    %v98 = vld [vmem:[#allocation2 + $0x118] sm:$0xff]
    %v99 = vld [vmem:[#allocation2 + $0x120] sm:$0xff]
    %v100 = vld [vmem:[#allocation2 + $0x128] sm:$0xff]
    %v101 = vld [vmem:[#allocation2 + $0x130] sm:$0xff]
    %v102 = vld [vmem:[#allocation2 + $0x138] sm:$0xff]
    %v103 = vld [vmem:[#allocation2 + $0x140] sm:$0xff]
    %v104 = vld [vmem:[#allocation2 + $0x148] sm:$0xff]
    %v105 = vld [vmem:[#allocation2 + $0x150] sm:$0xff]
    %v106 = vld [vmem:[#allocation2 + $0x158] sm:$0xff]
    %v107 = vld [vmem:[#allocation2 + $0x160] sm:$0xff]
    %v108 = vld [vmem:[#allocation2 + $0x168] sm:$0xff]
    %v109 = vld [vmem:[#allocation2 + $0x170] sm:$0xff]
    %v110 = vld [vmem:[#allocation2 + $0x178] sm:$0xff]
    %v111 = vld [vmem:[#allocation2 + $0x180] sm:$0xff]
    %v112 = vld [vmem:[#allocation2 + $0x188] sm:$0xff]
    %v113 = vld [vmem:[#allocation2 + $0x190] sm:$0xff]
    %v114 = vld [vmem:[#allocation2 + $0x198] sm:$0xff]
    %v115 = vld [vmem:[#allocation2 + $0x1a0] sm:$0xff]
    %v116 = vld [vmem:[#allocation2 + $0x1a8] sm:$0xff]
    %v117 = vld [vmem:[#allocation2 + $0x1b0] sm:$0xff]
    %v118 = vld [vmem:[#allocation2 + $0x1b8] sm:$0xff]
    %v119 = vld [vmem:[#allocation2 + $0x1c0] sm:$0xff]
    %v120 = vld [vmem:[#allocation2 + $0x1c8] sm:$0xff]
    %v121 = vld [vmem:[#allocation2 + $0x1d0] sm:$0xff]
    %v122 = vld [vmem:[#allocation2 + $0x1d8] sm:$0xff]
    %v123 = vld [vmem:[#allocation2 + $0x1e0] sm:$0xff]
    %v124 = vld [vmem:[#allocation2 + $0x1e8] sm:$0xff]
    %v125 = vld [vmem:[#allocation2 + $0x1f0] sm:$0xff]
    %v126 = vld [vmem:[#allocation2 + $0x1f8] sm:$0xff]
    %v127 = vld [vmem:[#allocation2 + $0x200] sm:$0xff]
    %v128 = vld [vmem:[#allocation2 + $0x208] sm:$0xff]
    %v129 = vld [vmem:[#allocation2 + $0x210] sm:$0xff]
    %v130 = vld [vmem:[#allocation2 + $0x218] sm:$0xff]
    %v131 = vld [vmem:[#allocation2 + $0x220] sm:$0xff]
    %v132 = vld [vmem:[#allocation2 + $0x228] sm:$0xff]
    %v133 = vld [vmem:[#allocation2 + $0x230] sm:$0xff]
    %v134 = vld [vmem:[#allocation2 + $0x238] sm:$0xff]
    %v135 = vld [vmem:[#allocation2 + $0x240] sm:$0xff]
    %v136 = vld [vmem:[#allocation2 + $0x248] sm:$0xff]
    %v137 = vld [vmem:[#allocation2 + $0x250] sm:$0xff]
    %v138 = vld [vmem:[#allocation2 + $0x258] sm:$0xff]
    %v139 = vld [vmem:[#allocation2 + $0x260] sm:$0xff]
    %v140 = vld [vmem:[#allocation2 + $0x268] sm:$0xff]
    %v141 = vld [vmem:[#allocation2 + $0x270] sm:$0xff]
    %v142 = vld [vmem:[#allocation2 + $0x278] sm:$0xff]
    %v143 = vld [vmem:[#allocation2 + $0x280] sm:$0xff]
    %v144 = vld [vmem:[#allocation2 + $0x288] sm:$0xff]
    %v145 = vld [vmem:[#allocation2 + $0x290] sm:$0xff]
    %v146 = vld [vmem:[#allocation2 + $0x298] sm:$0xff]
    %v147 = vld [vmem:[#allocation2 + $0x2a0] sm:$0xff]
    %v148 = vld [vmem:[#allocation2 + $0x2a8] sm:$0xff]
    %v149 = vld [vmem:[#allocation2 + $0x2b0] sm:$0xff]
    %v150 = vld [vmem:[#allocation2 + $0x2b8] sm:$0xff]
    %v151 = vld [vmem:[#allocation2 + $0x2c0] sm:$0xff]
    %v152 = vld [vmem:[#allocation2 + $0x2c8] sm:$0xff]
    %v153 = vld [vmem:[#allocation2 + $0x2d0] sm:$0xff]
    %v154 = vld [vmem:[#allocation2 + $0x2d8] sm:$0xff]
    %v155 = vld [vmem:[#allocation2 + $0x2e0] sm:$0xff]
    %v156 = vld [vmem:[#allocation2 + $0x2e8] sm:$0xff]
    %v157 = vld [vmem:[#allocation2 + $0x2f0] sm:$0xff]
    %v158 = vld [vmem:[#allocation2 + $0x2f8] sm:$0xff]
    %v159 = vld [vmem:[#allocation2 + $0x300] sm:$0xff]
    %v160 = vld [vmem:[#allocation2 + $0x308] sm:$0xff]
    %v161 = vld [vmem:[#allocation2 + $0x310] sm:$0xff]
    %v162 = vld [vmem:[#allocation2 + $0x318] sm:$0xff]
    %v163 = vld [vmem:[#allocation2 + $0x320] sm:$0xff]
    %v164 = vld [vmem:[#allocation2 + $0x328] sm:$0xff]
    %v165 = vld [vmem:[#allocation2 + $0x330] sm:$0xff]
    %v166 = vld [vmem:[#allocation2 + $0x338] sm:$0xff]
    %v167 = vld [vmem:[#allocation2 + $0x340] sm:$0xff]
    %v168 = vld [vmem:[#allocation2 + $0x348] sm:$0xff]
    %v169 = vld [vmem:[#allocation2 + $0x350] sm:$0xff]
    %v170 = vld [vmem:[#allocation2 + $0x358] sm:$0xff]
    %v171 = vld [vmem:[#allocation2 + $0x360] sm:$0xff]
    %v172 = vld [vmem:[#allocation2 + $0x368] sm:$0xff]
    %v173 = vld [vmem:[#allocation2 + $0x370] sm:$0xff]
    %v174 = vld [vmem:[#allocation2 + $0x378] sm:$0xff]
    %v175 = vld [vmem:[#allocation2 + $0x380] sm:$0xff]
    %v176 = vld [vmem:[#allocation2 + $0x388] sm:$0xff]
    %v177 = vld [vmem:[#allocation2 + $0x390] sm:$0xff]
    %v178 = vld [vmem:[#allocation2 + $0x398] sm:$0xff]
    %v179 = vld [vmem:[#allocation2 + $0x3a0] sm:$0xff]
    %v180 = vld [vmem:[#allocation2 + $0x3a8] sm:$0xff]
    %v181 = vld [vmem:[#allocation2 + $0x3b0] sm:$0xff]
    %v182 = vld [vmem:[#allocation2 + $0x3b8] sm:$0xff]
    %v183 = vld [vmem:[#allocation2 + $0x3c0] sm:$0xff]
    %v184 = vld [vmem:[#allocation2 + $0x3c8] sm:$0xff]
    %v185 = vld [vmem:[#allocation2 + $0x3d0] sm:$0xff]
    %v186 = vld [vmem:[#allocation2 + $0x3d8] sm:$0xff]
    %v187 = vld [vmem:[#allocation2 + $0x3e0] sm:$0xff]
    %v188 = vld [vmem:[#allocation2 + $0x3e8] sm:$0xff]
    %v189 = vld [vmem:[#allocation2 + $0x3f0] sm:$0xff]
    %v190 = vld [vmem:[#allocation2 + $0x3f8] sm:$0xff]
    %v191 = vld [vmem:[#allocation2 + $0x400] sm:$0xff]
    %v192 = vld [vmem:[#allocation2 + $0x408] sm:$0xff]
    %v193 = vld [vmem:[#allocation2 + $0x410] sm:$0xff]
    %v194 = vld [vmem:[#allocation2 + $0x418] sm:$0xff]
    %v195 = vld [vmem:[#allocation2 + $0x420] sm:$0xff]
    %v196 = vld [vmem:[#allocation2 + $0x428] sm:$0xff]
    %v197 = vld [vmem:[#allocation2 + $0x430] sm:$0xff]
    %v198 = vld [vmem:[#allocation2 + $0x438] sm:$0xff]
    %v199 = vld [vmem:[#allocation2 + $0x440] sm:$0xff]
    %v200 = vld [vmem:[#allocation2 + $0x448] sm:$0xff]
    %v201 = vld [vmem:[#allocation2 + $0x450] sm:$0xff]
    %v202 = vld [vmem:[#allocation2 + $0x458] sm:$0xff]
    %v203 = vld [vmem:[#allocation2 + $0x460] sm:$0xff]
    %v204 = vld [vmem:[#allocation2 + $0x468] sm:$0xff]
    %v205 = vld [vmem:[#allocation2 + $0x470] sm:$0xff]
    %v206 = vld [vmem:[#allocation2 + $0x478] sm:$0xff]
    %v207 = vld [vmem:[#allocation2 + $0x480] sm:$0xff]
    %v208 = vld [vmem:[#allocation2 + $0x488] sm:$0xff]
    %v209 = vld [vmem:[#allocation2 + $0x490] sm:$0xff]
    %v210 = vld [vmem:[#allocation2 + $0x498] sm:$0xff]
    %v211 = vld [vmem:[#allocation2 + $0x4a0] sm:$0xff]
    %v212 = vld [vmem:[#allocation2 + $0x4a8] sm:$0xff]
    %v213 = vld [vmem:[#allocation2 + $0x4b0] sm:$0xff]
    %v214 = vld [vmem:[#allocation2 + $0x4b8] sm:$0xff]
    %v215 = vld [vmem:[#allocation2 + $0x4c0] sm:$0xff]
    %v216 = vld [vmem:[#allocation2 + $0x4c8] sm:$0xff]
    %v217 = vld [vmem:[#allocation2 + $0x4d0] sm:$0xff]
    %v218 = vld [vmem:[#allocation2 + $0x4d8] sm:$0xff]
    %v219 = vld [vmem:[#allocation2 + $0x4e0] sm:$0xff]
    %v220 = vld [vmem:[#allocation2 + $0x4e8] sm:$0xff]
    %v221 = vld [vmem:[#allocation2 + $0x4f0] sm:$0xff]
    %v222 = vld [vmem:[#allocation2 + $0x4f8] sm:$0xff]
    %v223 = vld [vmem:[#allocation2 + $0x500] sm:$0xff]
    %v224 = vld [vmem:[#allocation2 + $0x508] sm:$0xff]
    %v225 = vld [vmem:[#allocation2 + $0x510] sm:$0xff]
    %v226 = vld [vmem:[#allocation2 + $0x518] sm:$0xff]
    %v227 = vld [vmem:[#allocation2 + $0x520] sm:$0xff]
    %v228 = vld [vmem:[#allocation2 + $0x528] sm:$0xff]
    %v229 = vld [vmem:[#allocation2 + $0x530] sm:$0xff]
    %v230 = vld [vmem:[#allocation2 + $0x538] sm:$0xff]
    %v231 = vld [vmem:[#allocation2 + $0x540] sm:$0xff]
    %v232 = vld [vmem:[#allocation2 + $0x548] sm:$0xff]
    %v233 = vld [vmem:[#allocation2 + $0x550] sm:$0xff]
    %v234 = vld [vmem:[#allocation2 + $0x558] sm:$0xff]
    %v235 = vld [vmem:[#allocation2 + $0x560] sm:$0xff]
    %v236 = vld [vmem:[#allocation2 + $0x568] sm:$0xff]
    %v237 = vld [vmem:[#allocation2 + $0x570] sm:$0xff]
    %v238 = vld [vmem:[#allocation2 + $0x578] sm:$0xff]
    %v239 = vld [vmem:[#allocation2 + $0x580] sm:$0xff]
    %v240 = vld [vmem:[#allocation2 + $0x588] sm:$0xff]
    %v241 = vld [vmem:[#allocation2 + $0x590] sm:$0xff]
    %v242 = vld [vmem:[#allocation2 + $0x598] sm:$0xff]
    %v243 = vld [vmem:[#allocation2 + $0x5a0] sm:$0xff]
    %v244 = vld [vmem:[#allocation2 + $0x5a8] sm:$0xff]
    %v245 = vld [vmem:[#allocation2 + $0x5b0] sm:$0xff]
    %v246 = vld [vmem:[#allocation2 + $0x5b8] sm:$0xff]
    %v247 = vld [vmem:[#allocation2 + $0x5c0] sm:$0xff]
    %v248 = vld [vmem:[#allocation2 + $0x5c8] sm:$0xff]
    %v249 = vld [vmem:[#allocation2 + $0x5d0] sm:$0xff]
    %v250 = vld [vmem:[#allocation2 + $0x5d8] sm:$0xff]
    %v251 = vld [vmem:[#allocation2 + $0x5e0] sm:$0xff]
    %v252 = vld [vmem:[#allocation2 + $0x5e8] sm:$0xff]
    %v253 = vld [vmem:[#allocation2 + $0x5f0] sm:$0xff]
    %v254 = vld [vmem:[#allocation2 + $0x5f8] sm:$0xff]
    %v255 = vld [vmem:[#allocation2 + $0x600] sm:$0xff]
    %v256 = vld [vmem:[#allocation2 + $0x608] sm:$0xff]
    %v257 = vld [vmem:[#allocation2 + $0x610] sm:$0xff]
    %v258 = vld [vmem:[#allocation2 + $0x618] sm:$0xff]
    %v259 = vld [vmem:[#allocation2 + $0x620] sm:$0xff]
    %v260 = vld [vmem:[#allocation2 + $0x628] sm:$0xff]
    %v261 = vld [vmem:[#allocation2 + $0x630] sm:$0xff]
    %v262 = vld [vmem:[#allocation2 + $0x638] sm:$0xff]
    %v263 = vld [vmem:[#allocation2 + $0x640] sm:$0xff]
    %v264 = vld [vmem:[#allocation2 + $0x648] sm:$0xff]
    %v265 = vld [vmem:[#allocation2 + $0x650] sm:$0xff]
    %v266 = vld [vmem:[#allocation2 + $0x658] sm:$0xff]
    %v267 = vld [vmem:[#allocation2 + $0x660] sm:$0xff]
    %v268 = vld [vmem:[#allocation2 + $0x668] sm:$0xff]
    %v269 = vld [vmem:[#allocation2 + $0x670] sm:$0xff]
    %v270 = vld [vmem:[#allocation2 + $0x678] sm:$0xff]
    %v271 = vld [vmem:[#allocation2 + $0x680] sm:$0xff]
    %v272 = vld [vmem:[#allocation2 + $0x688] sm:$0xff]
    %v273 = vld [vmem:[#allocation2 + $0x690] sm:$0xff]
    %v274 = vld [vmem:[#allocation2 + $0x698] sm:$0xff]
    %v275 = vld [vmem:[#allocation2 + $0x6a0] sm:$0xff]
    %v276 = vld [vmem:[#allocation2 + $0x6a8] sm:$0xff]
    %v277 = vld [vmem:[#allocation2 + $0x6b0] sm:$0xff]
    %v278 = vld [vmem:[#allocation2 + $0x6b8] sm:$0xff]
    %v279 = vld [vmem:[#allocation2 + $0x6c0] sm:$0xff]
    %v280 = vld [vmem:[#allocation2 + $0x6c8] sm:$0xff]
    %v281 = vld [vmem:[#allocation2 + $0x6d0] sm:$0xff]
    %v282 = vld [vmem:[#allocation2 + $0x6d8] sm:$0xff]
    %v283 = vld [vmem:[#allocation2 + $0x6e0] sm:$0xff]
    %v284 = vld [vmem:[#allocation2 + $0x6e8] sm:$0xff]
    %v285 = vld [vmem:[#allocation2 + $0x6f0] sm:$0xff]
    %v286 = vld [vmem:[#allocation2 + $0x6f8] sm:$0xff]
    %v287 = vld [vmem:[#allocation2 + $0x700] sm:$0xff]
    %v288 = vld [vmem:[#allocation2 + $0x708] sm:$0xff]
    %v289 = vld [vmem:[#allocation2 + $0x710] sm:$0xff]
    %v290 = vld [vmem:[#allocation2 + $0x718] sm:$0xff]
    %v291 = vld [vmem:[#allocation2 + $0x720] sm:$0xff]
    %v292 = vld [vmem:[#allocation2 + $0x728] sm:$0xff]
    %v293 = vld [vmem:[#allocation2 + $0x730] sm:$0xff]
    %v294 = vld [vmem:[#allocation2 + $0x738] sm:$0xff]
    %v295 = vld [vmem:[#allocation2 + $0x740] sm:$0xff]
    %v296 = vld [vmem:[#allocation2 + $0x748] sm:$0xff]
    %v297 = vld [vmem:[#allocation2 + $0x750] sm:$0xff]
    %v298 = vld [vmem:[#allocation2 + $0x758] sm:$0xff]
    %v299 = vld [vmem:[#allocation2 + $0x760] sm:$0xff]
    %v300 = vld [vmem:[#allocation2 + $0x768] sm:$0xff]
    %v301 = vld [vmem:[#allocation2 + $0x770] sm:$0xff]
    %v302 = vld [vmem:[#allocation2 + $0x778] sm:$0xff]
    %v303 = vld [vmem:[#allocation2 + $0x780] sm:$0xff]
    %v304 = vld [vmem:[#allocation2 + $0x788] sm:$0xff]
    %v305 = vld [vmem:[#allocation2 + $0x790] sm:$0xff]
    %v306 = vld [vmem:[#allocation2 + $0x798] sm:$0xff]
    %v307 = vld [vmem:[#allocation2 + $0x7a0] sm:$0xff]
    %v308 = vld [vmem:[#allocation2 + $0x7a8] sm:$0xff]
    %v309 = vld [vmem:[#allocation2 + $0x7b0] sm:$0xff]
    %v310 = vld [vmem:[#allocation2 + $0x7b8] sm:$0xff]
    %v311 = vld [vmem:[#allocation2 + $0x7c0] sm:$0xff]
    %v312 = vld [vmem:[#allocation2 + $0x7c8] sm:$0xff]
    %v313 = vld [vmem:[#allocation2 + $0x7d0] sm:$0xff]
    %v314 = vld [vmem:[#allocation2 + $0x7d8] sm:$0xff]
    %v315 = vld [vmem:[#allocation2 + $0x7e0] sm:$0xff]
    %v316 = vld [vmem:[#allocation2 + $0x7e8] sm:$0xff]
    %v317 = vld [vmem:[#allocation2 + $0x7f0] sm:$0xff]
    %v318 = vld [vmem:[#allocation2 + $0x7f8] sm:$0xff]
    %v319 = vld [vmem:[%s2] sm:$0xf]
    %v321 = vlaneseq
    %v322 = vshrl.u32 %v321, 7
    %v323 = vsub.s32 0, %v322
    %v324 = vrot.slane %v319, %v323
    %v325 = vlaneseq
    %v326 = vshrl.u32 %v325, 7
    %v327 = vsub.s32 1, %v326
    %v328 = vrot.slane %v319, %v327
    %v329 = vlaneseq
    %v330 = vshrl.u32 %v329, 7
    %v331 = vsub.s32 2, %v330
    %v332 = vrot.slane %v319, %v331
    %v333 = vlaneseq
    %v334 = vshrl.u32 %v333, 7
    %v335 = vsub.s32 3, %v334
    %v336 = vrot.slane %v319, %v335
    %v342 = vcombine.high %v62, %v62
    %v344 = vunpack.c.l.s4 1966171168
    %v345 = vunpack.c.0.s8 %v344
    %v346 = vlaneseq
    %v347 = vshrl.u32 %v346, 7
    %v348 = vsub.s32 %v345, %v347
    %v349 = vrot.slane %v62, %v348
    %v351 = vunpack.c.l.s4 1966171168
    %v352 = vunpack.c.0.s8 %v351
    %v353 = vlaneseq
    %v354 = vshrl.u32 %v353, 7
    %v355 = vsub.s32 %v352, %v354
    %v356 = vrot.slane %v342, %v355
    %v357 = vcombine.high %v349, %v349
    %v358 = vcombine.high %v356, %v356
    %v360 = vunpack.c.l.s4 1966171168
    %v361 = vunpack.c.0.s8 %v360
    %v362 = vlaneseq
    %v363 = vshrl.u32 %v362, 7
    %v364 = vsub.s32 %v361, %v363
    %v365 = vrot.slane %v349, %v364
    %v367 = vunpack.c.l.s4 1966171168
    %v368 = vunpack.c.0.s8 %v367
    %v369 = vlaneseq
    %v370 = vshrl.u32 %v369, 7
    %v371 = vsub.s32 %v368, %v370
    %v372 = vrot.slane %v356, %v371
    %v374 = vunpack.c.l.s4 1966171168
    %v375 = vunpack.c.0.s8 %v374
    %v376 = vlaneseq
    %v377 = vshrl.u32 %v376, 7
    %v378 = vsub.s32 %v375, %v377
    %v379 = vrot.slane %v357, %v378
    %v381 = vunpack.c.l.s4 1966171168
    %v382 = vunpack.c.0.s8 %v381
    %v383 = vlaneseq
    %v384 = vshrl.u32 %v383, 7
    %v385 = vsub.s32 %v382, %v384
    %v386 = vrot.slane %v358, %v385
    %v387 = vcombine.high %v365, %v365
    %v388 = vcombine.high %v372, %v372
    %v389 = vcombine.high %v379, %v379
    %v390 = vcombine.high %v386, %v386
    %v655 = vunpack.c.l.b16 %v63
    %v656 = vunpack.c.h.b16 %v63
    %v657 = vunpack.c.l.b16 %v64
    %v658 = vunpack.c.h.b16 %v64
    %v659 = vunpack.c.l.b16 %v65
    %v660 = vunpack.c.h.b16 %v65
    %v661 = vunpack.c.l.b16 %v66
    %v662 = vunpack.c.h.b16 %v66
    %v663 = vunpack.c.l.b16 %v67
    %v664 = vunpack.c.h.b16 %v67
    %v665 = vunpack.c.l.b16 %v68
    %v666 = vunpack.c.h.b16 %v68
    %v667 = vunpack.c.l.b16 %v69
    %v668 = vunpack.c.h.b16 %v69
    %v669 = vunpack.c.l.b16 %v70
    %v670 = vunpack.c.h.b16 %v70
    %v671 = vunpack.c.l.b16 %v71
    %v672 = vunpack.c.h.b16 %v71
    %v673 = vunpack.c.l.b16 %v72
    %v674 = vunpack.c.h.b16 %v72
    %v675 = vunpack.c.l.b16 %v73
    %v676 = vunpack.c.h.b16 %v73
    %v677 = vunpack.c.l.b16 %v74
    %v678 = vunpack.c.h.b16 %v74
    %v679 = vunpack.c.l.b16 %v75
    %v680 = vunpack.c.h.b16 %v75
    %v681 = vunpack.c.l.b16 %v76
    %v682 = vunpack.c.h.b16 %v76
    %v683 = vunpack.c.l.b16 %v77
    %v684 = vunpack.c.h.b16 %v77
    %v685 = vunpack.c.l.b16 %v78
    %v686 = vunpack.c.h.b16 %v78
    %v687 = vunpack.c.l.b16 %v79
    %v688 = vunpack.c.h.b16 %v79
    %v689 = vunpack.c.l.b16 %v80
    %v690 = vunpack.c.h.b16 %v80
    %v691 = vunpack.c.l.b16 %v81
    %v692 = vunpack.c.h.b16 %v81
    %v693 = vunpack.c.l.b16 %v82
    %v694 = vunpack.c.h.b16 %v82
    %v695 = vunpack.c.l.b16 %v83
    %v696 = vunpack.c.h.b16 %v83
    %v697 = vunpack.c.l.b16 %v84
    %v698 = vunpack.c.h.b16 %v84
    %v699 = vunpack.c.l.b16 %v85
    %v700 = vunpack.c.h.b16 %v85
    %v701 = vunpack.c.l.b16 %v86
    %v702 = vunpack.c.h.b16 %v86
    %v703 = vunpack.c.l.b16 %v87
    %v704 = vunpack.c.h.b16 %v87
    %v705 = vunpack.c.l.b16 %v88
    %v706 = vunpack.c.h.b16 %v88
    %v707 = vunpack.c.l.b16 %v89
    %v708 = vunpack.c.h.b16 %v89
    %v709 = vunpack.c.l.b16 %v90
    %v710 = vunpack.c.h.b16 %v90
    %v711 = vunpack.c.l.b16 %v91
    %v712 = vunpack.c.h.b16 %v91
    %v713 = vunpack.c.l.b16 %v92
    %v714 = vunpack.c.h.b16 %v92
    %v715 = vunpack.c.l.b16 %v93
    %v716 = vunpack.c.h.b16 %v93
    %v717 = vunpack.c.l.b16 %v94
    %v718 = vunpack.c.h.b16 %v94
    %v719 = vunpack.c.l.b16 %v95
    %v720 = vunpack.c.h.b16 %v95
    %v721 = vunpack.c.l.b16 %v96
    %v722 = vunpack.c.h.b16 %v96
    %v723 = vunpack.c.l.b16 %v97
    %v724 = vunpack.c.h.b16 %v97
    %v725 = vunpack.c.l.b16 %v98
    %v726 = vunpack.c.h.b16 %v98
    %v727 = vunpack.c.l.b16 %v99
    %v728 = vunpack.c.h.b16 %v99
    %v729 = vunpack.c.l.b16 %v100
    %v730 = vunpack.c.h.b16 %v100
    %v731 = vunpack.c.l.b16 %v101
    %v732 = vunpack.c.h.b16 %v101
    %v733 = vunpack.c.l.b16 %v102
    %v734 = vunpack.c.h.b16 %v102
    %v735 = vunpack.c.l.b16 %v103
    %v736 = vunpack.c.h.b16 %v103
    %v737 = vunpack.c.l.b16 %v104
    %v738 = vunpack.c.h.b16 %v104
    %v739 = vunpack.c.l.b16 %v105
    %v740 = vunpack.c.h.b16 %v105
    %v741 = vunpack.c.l.b16 %v106
    %v742 = vunpack.c.h.b16 %v106
    %v743 = vunpack.c.l.b16 %v107
    %v744 = vunpack.c.h.b16 %v107
    %v745 = vunpack.c.l.b16 %v108
    %v746 = vunpack.c.h.b16 %v108
    %v747 = vunpack.c.l.b16 %v109
    %v748 = vunpack.c.h.b16 %v109
    %v749 = vunpack.c.l.b16 %v110
    %v750 = vunpack.c.h.b16 %v110
    %v751 = vunpack.c.l.b16 %v111
    %v752 = vunpack.c.h.b16 %v111
    %v753 = vunpack.c.l.b16 %v112
    %v754 = vunpack.c.h.b16 %v112
    %v755 = vunpack.c.l.b16 %v113
    %v756 = vunpack.c.h.b16 %v113
    %v757 = vunpack.c.l.b16 %v114
    %v758 = vunpack.c.h.b16 %v114
    %v759 = vunpack.c.l.b16 %v115
    %v760 = vunpack.c.h.b16 %v115
    %v761 = vunpack.c.l.b16 %v116
    %v762 = vunpack.c.h.b16 %v116
    %v763 = vunpack.c.l.b16 %v117
    %v764 = vunpack.c.h.b16 %v117
    %v765 = vunpack.c.l.b16 %v118
    %v766 = vunpack.c.h.b16 %v118
    %v767 = vunpack.c.l.b16 %v119
    %v768 = vunpack.c.h.b16 %v119
    %v769 = vunpack.c.l.b16 %v120
    %v770 = vunpack.c.h.b16 %v120
    %v771 = vunpack.c.l.b16 %v121
    %v772 = vunpack.c.h.b16 %v121
    %v773 = vunpack.c.l.b16 %v122
    %v774 = vunpack.c.h.b16 %v122
    %v775 = vunpack.c.l.b16 %v123
    %v776 = vunpack.c.h.b16 %v123
    %v777 = vunpack.c.l.b16 %v124
    %v778 = vunpack.c.h.b16 %v124
    %v779 = vunpack.c.l.b16 %v125
    %v780 = vunpack.c.h.b16 %v125
    %v781 = vunpack.c.l.b16 %v126
    %v782 = vunpack.c.h.b16 %v126
    %v783 = vunpack.c.l.b16 %v127
    %v784 = vunpack.c.h.b16 %v127
    %v785 = vunpack.c.l.b16 %v128
    %v786 = vunpack.c.h.b16 %v128
    %v787 = vunpack.c.l.b16 %v129
    %v788 = vunpack.c.h.b16 %v129
    %v789 = vunpack.c.l.b16 %v130
    %v790 = vunpack.c.h.b16 %v130
    %v791 = vunpack.c.l.b16 %v131
    %v792 = vunpack.c.h.b16 %v131
    %v793 = vunpack.c.l.b16 %v132
    %v794 = vunpack.c.h.b16 %v132
    %v795 = vunpack.c.l.b16 %v133
    %v796 = vunpack.c.h.b16 %v133
    %v797 = vunpack.c.l.b16 %v134
    %v798 = vunpack.c.h.b16 %v134
    %v799 = vunpack.c.l.b16 %v135
    %v800 = vunpack.c.h.b16 %v135
    %v801 = vunpack.c.l.b16 %v136
    %v802 = vunpack.c.h.b16 %v136
    %v803 = vunpack.c.l.b16 %v137
    %v804 = vunpack.c.h.b16 %v137
    %v805 = vunpack.c.l.b16 %v138
    %v806 = vunpack.c.h.b16 %v138
    %v807 = vunpack.c.l.b16 %v139
    %v808 = vunpack.c.h.b16 %v139
    %v809 = vunpack.c.l.b16 %v140
    %v810 = vunpack.c.h.b16 %v140
    %v811 = vunpack.c.l.b16 %v141
    %v812 = vunpack.c.h.b16 %v141
    %v813 = vunpack.c.l.b16 %v142
    %v814 = vunpack.c.h.b16 %v142
    %v815 = vunpack.c.l.b16 %v143
    %v816 = vunpack.c.h.b16 %v143
    %v817 = vunpack.c.l.b16 %v144
    %v818 = vunpack.c.h.b16 %v144
    %v819 = vunpack.c.l.b16 %v145
    %v820 = vunpack.c.h.b16 %v145
    %v821 = vunpack.c.l.b16 %v146
    %v822 = vunpack.c.h.b16 %v146
    %v823 = vunpack.c.l.b16 %v147
    %v824 = vunpack.c.h.b16 %v147
    %v825 = vunpack.c.l.b16 %v148
    %v826 = vunpack.c.h.b16 %v148
    %v827 = vunpack.c.l.b16 %v149
    %v828 = vunpack.c.h.b16 %v149
    %v829 = vunpack.c.l.b16 %v150
    %v830 = vunpack.c.h.b16 %v150
    %v831 = vunpack.c.l.b16 %v151
    %v832 = vunpack.c.h.b16 %v151
    %v833 = vunpack.c.l.b16 %v152
    %v834 = vunpack.c.h.b16 %v152
    %v835 = vunpack.c.l.b16 %v153
    %v836 = vunpack.c.h.b16 %v153
    %v837 = vunpack.c.l.b16 %v154
    %v838 = vunpack.c.h.b16 %v154
    %v839 = vunpack.c.l.b16 %v155
    %v840 = vunpack.c.h.b16 %v155
    %v841 = vunpack.c.l.b16 %v156
    %v842 = vunpack.c.h.b16 %v156
    %v843 = vunpack.c.l.b16 %v157
    %v844 = vunpack.c.h.b16 %v157
    %v845 = vunpack.c.l.b16 %v158
    %v846 = vunpack.c.h.b16 %v158
    %v847 = vunpack.c.l.b16 %v159
    %v848 = vunpack.c.h.b16 %v159
    %v849 = vunpack.c.l.b16 %v160
    %v850 = vunpack.c.h.b16 %v160
    %v851 = vunpack.c.l.b16 %v161
    %v852 = vunpack.c.h.b16 %v161
    %v853 = vunpack.c.l.b16 %v162
    %v854 = vunpack.c.h.b16 %v162
    %v855 = vunpack.c.l.b16 %v163
    %v856 = vunpack.c.h.b16 %v163
    %v857 = vunpack.c.l.b16 %v164
    %v858 = vunpack.c.h.b16 %v164
    %v859 = vunpack.c.l.b16 %v165
    %v860 = vunpack.c.h.b16 %v165
    %v861 = vunpack.c.l.b16 %v166
    %v862 = vunpack.c.h.b16 %v166
    %v863 = vunpack.c.l.b16 %v167
    %v864 = vunpack.c.h.b16 %v167
    %v865 = vunpack.c.l.b16 %v168
    %v866 = vunpack.c.h.b16 %v168
    %v867 = vunpack.c.l.b16 %v169
    %v868 = vunpack.c.h.b16 %v169
    %v869 = vunpack.c.l.b16 %v170
    %v870 = vunpack.c.h.b16 %v170
    %v871 = vunpack.c.l.b16 %v171
    %v872 = vunpack.c.h.b16 %v171
    %v873 = vunpack.c.l.b16 %v172
    %v874 = vunpack.c.h.b16 %v172
    %v875 = vunpack.c.l.b16 %v173
    %v876 = vunpack.c.h.b16 %v173
    %v877 = vunpack.c.l.b16 %v174
    %v878 = vunpack.c.h.b16 %v174
    %v879 = vunpack.c.l.b16 %v175
    %v880 = vunpack.c.h.b16 %v175
    %v881 = vunpack.c.l.b16 %v176
    %v882 = vunpack.c.h.b16 %v176
    %v883 = vunpack.c.l.b16 %v177
    %v884 = vunpack.c.h.b16 %v177
    %v885 = vunpack.c.l.b16 %v178
    %v886 = vunpack.c.h.b16 %v178
    %v887 = vunpack.c.l.b16 %v179
    %v888 = vunpack.c.h.b16 %v179
    %v889 = vunpack.c.l.b16 %v180
    %v890 = vunpack.c.h.b16 %v180
    %v891 = vunpack.c.l.b16 %v181
    %v892 = vunpack.c.h.b16 %v181
    %v893 = vunpack.c.l.b16 %v182
    %v894 = vunpack.c.h.b16 %v182
    %v895 = vunpack.c.l.b16 %v183
    %v896 = vunpack.c.h.b16 %v183
    %v897 = vunpack.c.l.b16 %v184
    %v898 = vunpack.c.h.b16 %v184
    %v899 = vunpack.c.l.b16 %v185
    %v900 = vunpack.c.h.b16 %v185
    %v901 = vunpack.c.l.b16 %v186
    %v902 = vunpack.c.h.b16 %v186
    %v903 = vunpack.c.l.b16 %v187
    %v904 = vunpack.c.h.b16 %v187
    %v905 = vunpack.c.l.b16 %v188
    %v906 = vunpack.c.h.b16 %v188
    %v907 = vunpack.c.l.b16 %v189
    %v908 = vunpack.c.h.b16 %v189
    %v909 = vunpack.c.l.b16 %v190
    %v910 = vunpack.c.h.b16 %v190
    %v911 = vunpack.c.l.b16 %v191
    %v912 = vunpack.c.h.b16 %v191
    %v913 = vunpack.c.l.b16 %v192
    %v914 = vunpack.c.h.b16 %v192
    %v915 = vunpack.c.l.b16 %v193
    %v916 = vunpack.c.h.b16 %v193
    %v917 = vunpack.c.l.b16 %v194
    %v918 = vunpack.c.h.b16 %v194
    %v919 = vunpack.c.l.b16 %v195
    %v920 = vunpack.c.h.b16 %v195
    %v921 = vunpack.c.l.b16 %v196
    %v922 = vunpack.c.h.b16 %v196
    %v923 = vunpack.c.l.b16 %v197
    %v924 = vunpack.c.h.b16 %v197
    %v925 = vunpack.c.l.b16 %v198
    %v926 = vunpack.c.h.b16 %v198
    %v927 = vunpack.c.l.b16 %v199
    %v928 = vunpack.c.h.b16 %v199
    %v929 = vunpack.c.l.b16 %v200
    %v930 = vunpack.c.h.b16 %v200
    %v931 = vunpack.c.l.b16 %v201
    %v932 = vunpack.c.h.b16 %v201
    %v933 = vunpack.c.l.b16 %v202
    %v934 = vunpack.c.h.b16 %v202
    %v935 = vunpack.c.l.b16 %v203
    %v936 = vunpack.c.h.b16 %v203
    %v937 = vunpack.c.l.b16 %v204
    %v938 = vunpack.c.h.b16 %v204
    %v939 = vunpack.c.l.b16 %v205
    %v940 = vunpack.c.h.b16 %v205
    %v941 = vunpack.c.l.b16 %v206
    %v942 = vunpack.c.h.b16 %v206
    %v943 = vunpack.c.l.b16 %v207
    %v944 = vunpack.c.h.b16 %v207
    %v945 = vunpack.c.l.b16 %v208
    %v946 = vunpack.c.h.b16 %v208
    %v947 = vunpack.c.l.b16 %v209
    %v948 = vunpack.c.h.b16 %v209
    %v949 = vunpack.c.l.b16 %v210
    %v950 = vunpack.c.h.b16 %v210
    %v951 = vunpack.c.l.b16 %v211
    %v952 = vunpack.c.h.b16 %v211
    %v953 = vunpack.c.l.b16 %v212
    %v954 = vunpack.c.h.b16 %v212
    %v955 = vunpack.c.l.b16 %v213
    %v956 = vunpack.c.h.b16 %v213
    %v957 = vunpack.c.l.b16 %v214
    %v958 = vunpack.c.h.b16 %v214
    %v959 = vunpack.c.l.b16 %v215
    %v960 = vunpack.c.h.b16 %v215
    %v961 = vunpack.c.l.b16 %v216
    %v962 = vunpack.c.h.b16 %v216
    %v963 = vunpack.c.l.b16 %v217
    %v964 = vunpack.c.h.b16 %v217
    %v965 = vunpack.c.l.b16 %v218
    %v966 = vunpack.c.h.b16 %v218
    %v967 = vunpack.c.l.b16 %v219
    %v968 = vunpack.c.h.b16 %v219
    %v969 = vunpack.c.l.b16 %v220
    %v970 = vunpack.c.h.b16 %v220
    %v971 = vunpack.c.l.b16 %v221
    %v972 = vunpack.c.h.b16 %v221
    %v973 = vunpack.c.l.b16 %v222
    %v974 = vunpack.c.h.b16 %v222
    %v975 = vunpack.c.l.b16 %v223
    %v976 = vunpack.c.h.b16 %v223
    %v977 = vunpack.c.l.b16 %v224
    %v978 = vunpack.c.h.b16 %v224
    %v979 = vunpack.c.l.b16 %v225
    %v980 = vunpack.c.h.b16 %v225
    %v981 = vunpack.c.l.b16 %v226
    %v982 = vunpack.c.h.b16 %v226
    %v983 = vunpack.c.l.b16 %v227
    %v984 = vunpack.c.h.b16 %v227
    %v985 = vunpack.c.l.b16 %v228
    %v986 = vunpack.c.h.b16 %v228
    %v987 = vunpack.c.l.b16 %v229
    %v988 = vunpack.c.h.b16 %v229
    %v989 = vunpack.c.l.b16 %v230
    %v990 = vunpack.c.h.b16 %v230
    %v991 = vunpack.c.l.b16 %v231
    %v992 = vunpack.c.h.b16 %v231
    %v993 = vunpack.c.l.b16 %v232
    %v994 = vunpack.c.h.b16 %v232
    %v995 = vunpack.c.l.b16 %v233
    %v996 = vunpack.c.h.b16 %v233
    %v997 = vunpack.c.l.b16 %v234
    %v998 = vunpack.c.h.b16 %v234
    %v999 = vunpack.c.l.b16 %v235
    %v1000 = vunpack.c.h.b16 %v235
    %v1001 = vunpack.c.l.b16 %v236
    %v1002 = vunpack.c.h.b16 %v236
    %v1003 = vunpack.c.l.b16 %v237
    %v1004 = vunpack.c.h.b16 %v237
    %v1005 = vunpack.c.l.b16 %v238
    %v1006 = vunpack.c.h.b16 %v238
    %v1007 = vunpack.c.l.b16 %v239
    %v1008 = vunpack.c.h.b16 %v239
    %v1009 = vunpack.c.l.b16 %v240
    %v1010 = vunpack.c.h.b16 %v240
    %v1011 = vunpack.c.l.b16 %v241
    %v1012 = vunpack.c.h.b16 %v241
    %v1013 = vunpack.c.l.b16 %v242
    %v1014 = vunpack.c.h.b16 %v242
    %v1015 = vunpack.c.l.b16 %v243
    %v1016 = vunpack.c.h.b16 %v243
    %v1017 = vunpack.c.l.b16 %v244
    %v1018 = vunpack.c.h.b16 %v244
    %v1019 = vunpack.c.l.b16 %v245
    %v1020 = vunpack.c.h.b16 %v245
    %v1021 = vunpack.c.l.b16 %v246
    %v1022 = vunpack.c.h.b16 %v246
    %v1023 = vunpack.c.l.b16 %v247
    %v1024 = vunpack.c.h.b16 %v247
    %v1025 = vunpack.c.l.b16 %v248
    %v1026 = vunpack.c.h.b16 %v248
    %v1027 = vunpack.c.l.b16 %v249
    %v1028 = vunpack.c.h.b16 %v249
    %v1029 = vunpack.c.l.b16 %v250
    %v1030 = vunpack.c.h.b16 %v250
    %v1031 = vunpack.c.l.b16 %v251
    %v1032 = vunpack.c.h.b16 %v251
    %v1033 = vunpack.c.l.b16 %v252
    %v1034 = vunpack.c.h.b16 %v252
    %v1035 = vunpack.c.l.b16 %v253
    %v1036 = vunpack.c.h.b16 %v253
    %v1037 = vunpack.c.l.b16 %v254
    %v1038 = vunpack.c.h.b16 %v254
    %v1039 = vunpack.c.l.b16 %v255
    %v1040 = vunpack.c.h.b16 %v255
    %v1041 = vunpack.c.l.b16 %v256
    %v1042 = vunpack.c.h.b16 %v256
    %v1043 = vunpack.c.l.b16 %v257
    %v1044 = vunpack.c.h.b16 %v257
    %v1045 = vunpack.c.l.b16 %v258
    %v1046 = vunpack.c.h.b16 %v258
    %v1047 = vunpack.c.l.b16 %v259
    %v1048 = vunpack.c.h.b16 %v259
    %v1049 = vunpack.c.l.b16 %v260
    %v1050 = vunpack.c.h.b16 %v260
    %v1051 = vunpack.c.l.b16 %v261
    %v1052 = vunpack.c.h.b16 %v261
    %v1053 = vunpack.c.l.b16 %v262
    %v1054 = vunpack.c.h.b16 %v262
    %v1055 = vunpack.c.l.b16 %v263
    %v1056 = vunpack.c.h.b16 %v263
    %v1057 = vunpack.c.l.b16 %v264
    %v1058 = vunpack.c.h.b16 %v264
    %v1059 = vunpack.c.l.b16 %v265
    %v1060 = vunpack.c.h.b16 %v265
    %v1061 = vunpack.c.l.b16 %v266
    %v1062 = vunpack.c.h.b16 %v266
    %v1063 = vunpack.c.l.b16 %v267
    %v1064 = vunpack.c.h.b16 %v267
    %v1065 = vunpack.c.l.b16 %v268
    %v1066 = vunpack.c.h.b16 %v268
    %v1067 = vunpack.c.l.b16 %v269
    %v1068 = vunpack.c.h.b16 %v269
    %v1069 = vunpack.c.l.b16 %v270
    %v1070 = vunpack.c.h.b16 %v270
    %v1071 = vunpack.c.l.b16 %v271
    %v1072 = vunpack.c.h.b16 %v271
    %v1073 = vunpack.c.l.b16 %v272
    %v1074 = vunpack.c.h.b16 %v272
    %v1075 = vunpack.c.l.b16 %v273
    %v1076 = vunpack.c.h.b16 %v273
    %v1077 = vunpack.c.l.b16 %v274
    %v1078 = vunpack.c.h.b16 %v274
    %v1079 = vunpack.c.l.b16 %v275
    %v1080 = vunpack.c.h.b16 %v275
    %v1081 = vunpack.c.l.b16 %v276
    %v1082 = vunpack.c.h.b16 %v276
    %v1083 = vunpack.c.l.b16 %v277
    %v1084 = vunpack.c.h.b16 %v277
    %v1085 = vunpack.c.l.b16 %v278
    %v1086 = vunpack.c.h.b16 %v278
    %v1087 = vunpack.c.l.b16 %v279
    %v1088 = vunpack.c.h.b16 %v279
    %v1089 = vunpack.c.l.b16 %v280
    %v1090 = vunpack.c.h.b16 %v280
    %v1091 = vunpack.c.l.b16 %v281
    %v1092 = vunpack.c.h.b16 %v281
    %v1093 = vunpack.c.l.b16 %v282
    %v1094 = vunpack.c.h.b16 %v282
    %v1095 = vunpack.c.l.b16 %v283
    %v1096 = vunpack.c.h.b16 %v283
    %v1097 = vunpack.c.l.b16 %v284
    %v1098 = vunpack.c.h.b16 %v284
    %v1099 = vunpack.c.l.b16 %v285
    %v1100 = vunpack.c.h.b16 %v285
    %v1101 = vunpack.c.l.b16 %v286
    %v1102 = vunpack.c.h.b16 %v286
    %v1103 = vunpack.c.l.b16 %v287
    %v1104 = vunpack.c.h.b16 %v287
    %v1105 = vunpack.c.l.b16 %v288
    %v1106 = vunpack.c.h.b16 %v288
    %v1107 = vunpack.c.l.b16 %v289
    %v1108 = vunpack.c.h.b16 %v289
    %v1109 = vunpack.c.l.b16 %v290
    %v1110 = vunpack.c.h.b16 %v290
    %v1111 = vunpack.c.l.b16 %v291
    %v1112 = vunpack.c.h.b16 %v291
    %v1113 = vunpack.c.l.b16 %v292
    %v1114 = vunpack.c.h.b16 %v292
    %v1115 = vunpack.c.l.b16 %v293
    %v1116 = vunpack.c.h.b16 %v293
    %v1117 = vunpack.c.l.b16 %v294
    %v1118 = vunpack.c.h.b16 %v294
    %v1119 = vunpack.c.l.b16 %v295
    %v1120 = vunpack.c.h.b16 %v295
    %v1121 = vunpack.c.l.b16 %v296
    %v1122 = vunpack.c.h.b16 %v296
    %v1123 = vunpack.c.l.b16 %v297
    %v1124 = vunpack.c.h.b16 %v297
    %v1125 = vunpack.c.l.b16 %v298
    %v1126 = vunpack.c.h.b16 %v298
    %v1127 = vunpack.c.l.b16 %v299
    %v1128 = vunpack.c.h.b16 %v299
    %v1129 = vunpack.c.l.b16 %v300
    %v1130 = vunpack.c.h.b16 %v300
    %v1131 = vunpack.c.l.b16 %v301
    %v1132 = vunpack.c.h.b16 %v301
    %v1133 = vunpack.c.l.b16 %v302
    %v1134 = vunpack.c.h.b16 %v302
    %v1135 = vunpack.c.l.b16 %v303
    %v1136 = vunpack.c.h.b16 %v303
    %v1137 = vunpack.c.l.b16 %v304
    %v1138 = vunpack.c.h.b16 %v304
    %v1139 = vunpack.c.l.b16 %v305
    %v1140 = vunpack.c.h.b16 %v305
    %v1141 = vunpack.c.l.b16 %v306
    %v1142 = vunpack.c.h.b16 %v306
    %v1143 = vunpack.c.l.b16 %v307
    %v1144 = vunpack.c.h.b16 %v307
    %v1145 = vunpack.c.l.b16 %v308
    %v1146 = vunpack.c.h.b16 %v308
    %v1147 = vunpack.c.l.b16 %v309
    %v1148 = vunpack.c.h.b16 %v309
    %v1149 = vunpack.c.l.b16 %v310
    %v1150 = vunpack.c.h.b16 %v310
    %v1151 = vunpack.c.l.b16 %v311
    %v1152 = vunpack.c.h.b16 %v311
    %v1153 = vunpack.c.l.b16 %v312
    %v1154 = vunpack.c.h.b16 %v312
    %v1155 = vunpack.c.l.b16 %v313
    %v1156 = vunpack.c.h.b16 %v313
    %v1157 = vunpack.c.l.b16 %v314
    %v1158 = vunpack.c.h.b16 %v314
    %v1159 = vunpack.c.l.b16 %v315
    %v1160 = vunpack.c.h.b16 %v315
    %v1161 = vunpack.c.l.b16 %v316
    %v1162 = vunpack.c.h.b16 %v316
    %v1163 = vunpack.c.l.b16 %v317
    %v1164 = vunpack.c.h.b16 %v317
    %v1165 = vunpack.c.l.b16 %v318
    %v1166 = vunpack.c.h.b16 %v318
    %v1167 = vpack.c.b16 %v659, %v655
    %v1168 = vpack.c.b16 %v660, %v656
    %v1169 = vpack.c.b16 %v661, %v657
    %v1170 = vpack.c.b16 %v662, %v658
    %v1171 = vpack.c.b16 %v667, %v663
    %v1172 = vpack.c.b16 %v668, %v664
    %v1173 = vpack.c.b16 %v669, %v665
    %v1174 = vpack.c.b16 %v670, %v666
    %v1175 = vpack.c.b16 %v675, %v671
    %v1176 = vpack.c.b16 %v676, %v672
    %v1177 = vpack.c.b16 %v677, %v673
    %v1178 = vpack.c.b16 %v678, %v674
    %v1179 = vpack.c.b16 %v683, %v679
    %v1180 = vpack.c.b16 %v684, %v680
    %v1181 = vpack.c.b16 %v685, %v681
    %v1182 = vpack.c.b16 %v686, %v682
    %v1183 = vpack.c.b16 %v691, %v687
    %v1184 = vpack.c.b16 %v692, %v688
    %v1185 = vpack.c.b16 %v693, %v689
    %v1186 = vpack.c.b16 %v694, %v690
    %v1187 = vpack.c.b16 %v699, %v695
    %v1188 = vpack.c.b16 %v700, %v696
    %v1189 = vpack.c.b16 %v701, %v697
    %v1190 = vpack.c.b16 %v702, %v698
    %v1191 = vpack.c.b16 %v707, %v703
    %v1192 = vpack.c.b16 %v708, %v704
    %v1193 = vpack.c.b16 %v709, %v705
    %v1194 = vpack.c.b16 %v710, %v706
    %v1195 = vpack.c.b16 %v715, %v711
    %v1196 = vpack.c.b16 %v716, %v712
    %v1197 = vpack.c.b16 %v717, %v713
    %v1198 = vpack.c.b16 %v718, %v714
    %v1199 = vpack.c.b16 %v723, %v719
    %v1200 = vpack.c.b16 %v724, %v720
    %v1201 = vpack.c.b16 %v725, %v721
    %v1202 = vpack.c.b16 %v726, %v722
    %v1203 = vpack.c.b16 %v731, %v727
    %v1204 = vpack.c.b16 %v732, %v728
    %v1205 = vpack.c.b16 %v733, %v729
    %v1206 = vpack.c.b16 %v734, %v730
    %v1207 = vpack.c.b16 %v739, %v735
    %v1208 = vpack.c.b16 %v740, %v736
    %v1209 = vpack.c.b16 %v741, %v737
    %v1210 = vpack.c.b16 %v742, %v738
    %v1211 = vpack.c.b16 %v747, %v743
    %v1212 = vpack.c.b16 %v748, %v744
    %v1213 = vpack.c.b16 %v749, %v745
    %v1214 = vpack.c.b16 %v750, %v746
    %v1215 = vpack.c.b16 %v755, %v751
    %v1216 = vpack.c.b16 %v756, %v752
    %v1217 = vpack.c.b16 %v757, %v753
    %v1218 = vpack.c.b16 %v758, %v754
    %v1219 = vpack.c.b16 %v763, %v759
    %v1220 = vpack.c.b16 %v764, %v760
    %v1221 = vpack.c.b16 %v765, %v761
    %v1222 = vpack.c.b16 %v766, %v762
    %v1223 = vpack.c.b16 %v771, %v767
    %v1224 = vpack.c.b16 %v772, %v768
    %v1225 = vpack.c.b16 %v773, %v769
    %v1226 = vpack.c.b16 %v774, %v770
    %v1227 = vpack.c.b16 %v779, %v775
    %v1228 = vpack.c.b16 %v780, %v776
    %v1229 = vpack.c.b16 %v781, %v777
    %v1230 = vpack.c.b16 %v782, %v778
    %v1231 = vpack.c.b16 %v787, %v783
    %v1232 = vpack.c.b16 %v788, %v784
    %v1233 = vpack.c.b16 %v789, %v785
    %v1234 = vpack.c.b16 %v790, %v786
    %v1235 = vpack.c.b16 %v795, %v791
    %v1236 = vpack.c.b16 %v796, %v792
    %v1237 = vpack.c.b16 %v797, %v793
    %v1238 = vpack.c.b16 %v798, %v794
    %v1239 = vpack.c.b16 %v803, %v799
    %v1240 = vpack.c.b16 %v804, %v800
    %v1241 = vpack.c.b16 %v805, %v801
    %v1242 = vpack.c.b16 %v806, %v802
    %v1243 = vpack.c.b16 %v811, %v807
    %v1244 = vpack.c.b16 %v812, %v808
    %v1245 = vpack.c.b16 %v813, %v809
    %v1246 = vpack.c.b16 %v814, %v810
    %v1247 = vpack.c.b16 %v819, %v815
    %v1248 = vpack.c.b16 %v820, %v816
    %v1249 = vpack.c.b16 %v821, %v817
    %v1250 = vpack.c.b16 %v822, %v818
    %v1251 = vpack.c.b16 %v827, %v823
    %v1252 = vpack.c.b16 %v828, %v824
    %v1253 = vpack.c.b16 %v829, %v825
    %v1254 = vpack.c.b16 %v830, %v826
    %v1255 = vpack.c.b16 %v835, %v831
    %v1256 = vpack.c.b16 %v836, %v832
    %v1257 = vpack.c.b16 %v837, %v833
    %v1258 = vpack.c.b16 %v838, %v834
    %v1259 = vpack.c.b16 %v843, %v839
    %v1260 = vpack.c.b16 %v844, %v840
    %v1261 = vpack.c.b16 %v845, %v841
    %v1262 = vpack.c.b16 %v846, %v842
    %v1263 = vpack.c.b16 %v851, %v847
    %v1264 = vpack.c.b16 %v852, %v848
    %v1265 = vpack.c.b16 %v853, %v849
    %v1266 = vpack.c.b16 %v854, %v850
    %v1267 = vpack.c.b16 %v859, %v855
    %v1268 = vpack.c.b16 %v860, %v856
    %v1269 = vpack.c.b16 %v861, %v857
    %v1270 = vpack.c.b16 %v862, %v858
    %v1271 = vpack.c.b16 %v867, %v863
    %v1272 = vpack.c.b16 %v868, %v864
    %v1273 = vpack.c.b16 %v869, %v865
    %v1274 = vpack.c.b16 %v870, %v866
    %v1275 = vpack.c.b16 %v875, %v871
    %v1276 = vpack.c.b16 %v876, %v872
    %v1277 = vpack.c.b16 %v877, %v873
    %v1278 = vpack.c.b16 %v878, %v874
    %v1279 = vpack.c.b16 %v883, %v879
    %v1280 = vpack.c.b16 %v884, %v880
    %v1281 = vpack.c.b16 %v885, %v881
    %v1282 = vpack.c.b16 %v886, %v882
    %v1283 = vpack.c.b16 %v891, %v887
    %v1284 = vpack.c.b16 %v892, %v888
    %v1285 = vpack.c.b16 %v893, %v889
    %v1286 = vpack.c.b16 %v894, %v890
    %v1287 = vpack.c.b16 %v899, %v895
    %v1288 = vpack.c.b16 %v900, %v896
    %v1289 = vpack.c.b16 %v901, %v897
    %v1290 = vpack.c.b16 %v902, %v898
    %v1291 = vpack.c.b16 %v907, %v903
    %v1292 = vpack.c.b16 %v908, %v904
    %v1293 = vpack.c.b16 %v909, %v905
    %v1294 = vpack.c.b16 %v910, %v906
    %v1295 = vpack.c.b16 %v915, %v911
    %v1296 = vpack.c.b16 %v916, %v912
    %v1297 = vpack.c.b16 %v917, %v913
    %v1298 = vpack.c.b16 %v918, %v914
    %v1299 = vpack.c.b16 %v923, %v919
    %v1300 = vpack.c.b16 %v924, %v920
    %v1301 = vpack.c.b16 %v925, %v921
    %v1302 = vpack.c.b16 %v926, %v922
    %v1303 = vpack.c.b16 %v931, %v927
    %v1304 = vpack.c.b16 %v932, %v928
    %v1305 = vpack.c.b16 %v933, %v929
    %v1306 = vpack.c.b16 %v934, %v930
    %v1307 = vpack.c.b16 %v939, %v935
    %v1308 = vpack.c.b16 %v940, %v936
    %v1309 = vpack.c.b16 %v941, %v937
    %v1310 = vpack.c.b16 %v942, %v938
    %v1311 = vpack.c.b16 %v947, %v943
    %v1312 = vpack.c.b16 %v948, %v944
    %v1313 = vpack.c.b16 %v949, %v945
    %v1314 = vpack.c.b16 %v950, %v946
    %v1315 = vpack.c.b16 %v955, %v951
    %v1316 = vpack.c.b16 %v956, %v952
    %v1317 = vpack.c.b16 %v957, %v953
    %v1318 = vpack.c.b16 %v958, %v954
    %v1319 = vpack.c.b16 %v963, %v959
    %v1320 = vpack.c.b16 %v964, %v960
    %v1321 = vpack.c.b16 %v965, %v961
    %v1322 = vpack.c.b16 %v966, %v962
    %v1323 = vpack.c.b16 %v971, %v967
    %v1324 = vpack.c.b16 %v972, %v968
    %v1325 = vpack.c.b16 %v973, %v969
    %v1326 = vpack.c.b16 %v974, %v970
    %v1327 = vpack.c.b16 %v979, %v975
    %v1328 = vpack.c.b16 %v980, %v976
    %v1329 = vpack.c.b16 %v981, %v977
    %v1330 = vpack.c.b16 %v982, %v978
    %v1331 = vpack.c.b16 %v987, %v983
    %v1332 = vpack.c.b16 %v988, %v984
    %v1333 = vpack.c.b16 %v989, %v985
    %v1334 = vpack.c.b16 %v990, %v986
    %v1335 = vpack.c.b16 %v995, %v991
    %v1336 = vpack.c.b16 %v996, %v992
    %v1337 = vpack.c.b16 %v997, %v993
    %v1338 = vpack.c.b16 %v998, %v994
    %v1339 = vpack.c.b16 %v1003, %v999
    %v1340 = vpack.c.b16 %v1004, %v1000
    %v1341 = vpack.c.b16 %v1005, %v1001
    %v1342 = vpack.c.b16 %v1006, %v1002
    %v1343 = vpack.c.b16 %v1011, %v1007
    %v1344 = vpack.c.b16 %v1012, %v1008
    %v1345 = vpack.c.b16 %v1013, %v1009
    %v1346 = vpack.c.b16 %v1014, %v1010
    %v1347 = vpack.c.b16 %v1019, %v1015
    %v1348 = vpack.c.b16 %v1020, %v1016
    %v1349 = vpack.c.b16 %v1021, %v1017
    %v1350 = vpack.c.b16 %v1022, %v1018
    %v1351 = vpack.c.b16 %v1027, %v1023
    %v1352 = vpack.c.b16 %v1028, %v1024
    %v1353 = vpack.c.b16 %v1029, %v1025
    %v1354 = vpack.c.b16 %v1030, %v1026
    %v1355 = vpack.c.b16 %v1035, %v1031
    %v1356 = vpack.c.b16 %v1036, %v1032
    %v1357 = vpack.c.b16 %v1037, %v1033
    %v1358 = vpack.c.b16 %v1038, %v1034
    %v1359 = vpack.c.b16 %v1043, %v1039
    %v1360 = vpack.c.b16 %v1044, %v1040
    %v1361 = vpack.c.b16 %v1045, %v1041
    %v1362 = vpack.c.b16 %v1046, %v1042
    %v1363 = vpack.c.b16 %v1051, %v1047
    %v1364 = vpack.c.b16 %v1052, %v1048
    %v1365 = vpack.c.b16 %v1053, %v1049
    %v1366 = vpack.c.b16 %v1054, %v1050
    %v1367 = vpack.c.b16 %v1059, %v1055
    %v1368 = vpack.c.b16 %v1060, %v1056
    %v1369 = vpack.c.b16 %v1061, %v1057
    %v1370 = vpack.c.b16 %v1062, %v1058
    %v1371 = vpack.c.b16 %v1067, %v1063
    %v1372 = vpack.c.b16 %v1068, %v1064
    %v1373 = vpack.c.b16 %v1069, %v1065
    %v1374 = vpack.c.b16 %v1070, %v1066
    %v1375 = vpack.c.b16 %v1075, %v1071
    %v1376 = vpack.c.b16 %v1076, %v1072
    %v1377 = vpack.c.b16 %v1077, %v1073
    %v1378 = vpack.c.b16 %v1078, %v1074
    %v1379 = vpack.c.b16 %v1083, %v1079
    %v1380 = vpack.c.b16 %v1084, %v1080
    %v1381 = vpack.c.b16 %v1085, %v1081
    %v1382 = vpack.c.b16 %v1086, %v1082
    %v1383 = vpack.c.b16 %v1091, %v1087
    %v1384 = vpack.c.b16 %v1092, %v1088
    %v1385 = vpack.c.b16 %v1093, %v1089
    %v1386 = vpack.c.b16 %v1094, %v1090
    %v1387 = vpack.c.b16 %v1099, %v1095
    %v1388 = vpack.c.b16 %v1100, %v1096
    %v1389 = vpack.c.b16 %v1101, %v1097
    %v1390 = vpack.c.b16 %v1102, %v1098
    %v1391 = vpack.c.b16 %v1107, %v1103
    %v1392 = vpack.c.b16 %v1108, %v1104
    %v1393 = vpack.c.b16 %v1109, %v1105
    %v1394 = vpack.c.b16 %v1110, %v1106
    %v1395 = vpack.c.b16 %v1115, %v1111
    %v1396 = vpack.c.b16 %v1116, %v1112
    %v1397 = vpack.c.b16 %v1117, %v1113
    %v1398 = vpack.c.b16 %v1118, %v1114
    %v1399 = vpack.c.b16 %v1123, %v1119
    %v1400 = vpack.c.b16 %v1124, %v1120
    %v1401 = vpack.c.b16 %v1125, %v1121
    %v1402 = vpack.c.b16 %v1126, %v1122
    %v1403 = vpack.c.b16 %v1131, %v1127
    %v1404 = vpack.c.b16 %v1132, %v1128
    %v1405 = vpack.c.b16 %v1133, %v1129
    %v1406 = vpack.c.b16 %v1134, %v1130
    %v1407 = vpack.c.b16 %v1139, %v1135
    %v1408 = vpack.c.b16 %v1140, %v1136
    %v1409 = vpack.c.b16 %v1141, %v1137
    %v1410 = vpack.c.b16 %v1142, %v1138
    %v1411 = vpack.c.b16 %v1147, %v1143
    %v1412 = vpack.c.b16 %v1148, %v1144
    %v1413 = vpack.c.b16 %v1149, %v1145
    %v1414 = vpack.c.b16 %v1150, %v1146
    %v1415 = vpack.c.b16 %v1155, %v1151
    %v1416 = vpack.c.b16 %v1156, %v1152
    %v1417 = vpack.c.b16 %v1157, %v1153
    %v1418 = vpack.c.b16 %v1158, %v1154
    %v1419 = vpack.c.b16 %v1163, %v1159
    %v1420 = vpack.c.b16 %v1164, %v1160
    %v1421 = vpack.c.b16 %v1165, %v1161
    %v1422 = vpack.c.b16 %v1166, %v1162
    %1679 = vmatprep.subr.bf16.mxu0 %v1168
    %1680 = vmatpush1.bf16.msra.mxu0 %v1167
    %1681 = vmatprep.subr.bf16.mxu0 %v1172
    %1682 = vmatpush1.bf16.msra.mxu0 %v1171
    %1683 = vmatprep.subr.bf16.mxu0 %v1176
    %1684 = vmatpush1.bf16.msra.mxu0 %v1175
    %1685 = vmatprep.subr.bf16.mxu0 %v1180
    %1686 = vmatpush1.bf16.msra.mxu0 %v1179
    %1687 = vmatprep.subr.bf16.mxu0 %v1184
    %1688 = vmatpush1.bf16.msra.mxu0 %v1183
    %1689 = vmatprep.subr.bf16.mxu0 %v1188
    %1690 = vmatpush1.bf16.msra.mxu0 %v1187
    %1691 = vmatprep.subr.bf16.mxu0 %v1192
    %1692 = vmatpush1.bf16.msra.mxu0 %v1191
    %1693 = vmatprep.subr.bf16.mxu0 %v1196
    %1694 = vmatpush1.bf16.msra.mxu0 %v1195
    %1695 = vmatprep.subr.bf16.mxu0 %v1200
    %1696 = vmatpush1.bf16.msra.mxu0 %v1199
    %1697 = vmatprep.subr.bf16.mxu0 %v1204
    %1698 = vmatpush1.bf16.msra.mxu0 %v1203
    %1699 = vmatprep.subr.bf16.mxu0 %v1208
    %1700 = vmatpush1.bf16.msra.mxu0 %v1207
    %1701 = vmatprep.subr.bf16.mxu0 %v1212
    %1702 = vmatpush1.bf16.msra.mxu0 %v1211
    %1703 = vmatprep.subr.bf16.mxu0 %v1216
    %1704 = vmatpush1.bf16.msra.mxu0 %v1215
    %1705 = vmatprep.subr.bf16.mxu0 %v1220
    %1706 = vmatpush1.bf16.msra.mxu0 %v1219
    %1707 = vmatprep.subr.bf16.mxu0 %v1224
    %1708 = vmatpush1.bf16.msra.mxu0 %v1223
    %1709 = vmatprep.subr.bf16.mxu0 %v1228
    %1710 = vmatpush1.bf16.msra.mxu0 %v1227
    %1711 = vmatprep.mubr.bf16.mxu0 %v379
    %1712 = vmatmul.mubr.bf16.gmra.mrb[0].mxu0 %v365
    %v1713 = vpop.f32.mrb[0].mxu0
    %v1714 = vadd.f32 %v324, %v1713
    %v1715 = vpop.f32.mrb[0].mxu0
    %v1716 = vadd.f32 %v328, %v1715
    %v1717 = vpop.f32.mrb[0].mxu0
    %v1718 = vpop.f32.mrb[0].mxu0
    %1719 = vdwg.mxu0
    %1720 = vmatprep.subr.bf16.mxu0 %v1232
    %1721 = vmatpush1.bf16.msra.mxu0 %v1231
    %1722 = vmatprep.subr.bf16.mxu0 %v1236
    %1723 = vmatpush1.bf16.msra.mxu0 %v1235
    %1724 = vmatprep.subr.bf16.mxu0 %v1240
    %1725 = vmatpush1.bf16.msra.mxu0 %v1239
    %1726 = vmatprep.subr.bf16.mxu0 %v1244
    %1727 = vmatpush1.bf16.msra.mxu0 %v1243
    %1728 = vmatprep.subr.bf16.mxu0 %v1248
    %1729 = vmatpush1.bf16.msra.mxu0 %v1247
    %1730 = vmatprep.subr.bf16.mxu0 %v1252
    %1731 = vmatpush1.bf16.msra.mxu0 %v1251
    %1732 = vmatprep.subr.bf16.mxu0 %v1256
    %1733 = vmatpush1.bf16.msra.mxu0 %v1255
    %1734 = vmatprep.subr.bf16.mxu0 %v1260
    %1735 = vmatpush1.bf16.msra.mxu0 %v1259
    %1736 = vmatprep.subr.bf16.mxu0 %v1264
    %1737 = vmatpush1.bf16.msra.mxu0 %v1263
    %1738 = vmatprep.subr.bf16.mxu0 %v1268
    %1739 = vmatpush1.bf16.msra.mxu0 %v1267
    %1740 = vmatprep.subr.bf16.mxu0 %v1272
    %1741 = vmatpush1.bf16.msra.mxu0 %v1271
    %1742 = vmatprep.subr.bf16.mxu0 %v1276
    %1743 = vmatpush1.bf16.msra.mxu0 %v1275
    %1744 = vmatprep.subr.bf16.mxu0 %v1280
    %1745 = vmatpush1.bf16.msra.mxu0 %v1279
    %1746 = vmatprep.subr.bf16.mxu0 %v1284
    %1747 = vmatpush1.bf16.msra.mxu0 %v1283
    %1748 = vmatprep.subr.bf16.mxu0 %v1288
    %1749 = vmatpush1.bf16.msra.mxu0 %v1287
    %1750 = vmatprep.subr.bf16.mxu0 %v1292
    %1751 = vmatpush1.bf16.msra.mxu0 %v1291
    %1752 = vmatprep.mubr.bf16.mxu0 %v389
    %1753 = vmatmul.mubr.bf16.gmra.mrb[0].mxu0 %v387
    %v1754 = vpop.f32.mrb[0].mxu0
    %v1755 = vadd.f32 %v1714, %v1754
    %v1756 = vpop.f32.mrb[0].mxu0
    %v1757 = vadd.f32 %v1716, %v1756
    %v1758 = vpop.f32.mrb[0].mxu0
    %v1759 = vpop.f32.mrb[0].mxu0
    %1760 = vdwg.mxu0
    %1761 = vmatprep.subr.bf16.mxu0 %v1296
    %1762 = vmatpush1.bf16.msra.mxu0 %v1295
    %1763 = vmatprep.subr.bf16.mxu0 %v1300
    %1764 = vmatpush1.bf16.msra.mxu0 %v1299
    %1765 = vmatprep.subr.bf16.mxu0 %v1304
    %1766 = vmatpush1.bf16.msra.mxu0 %v1303
    %1767 = vmatprep.subr.bf16.mxu0 %v1308
    %1768 = vmatpush1.bf16.msra.mxu0 %v1307
    %1769 = vmatprep.subr.bf16.mxu0 %v1312
    %1770 = vmatpush1.bf16.msra.mxu0 %v1311
    %1771 = vmatprep.subr.bf16.mxu0 %v1316
    %1772 = vmatpush1.bf16.msra.mxu0 %v1315
    %1773 = vmatprep.subr.bf16.mxu0 %v1320
    %1774 = vmatpush1.bf16.msra.mxu0 %v1319
    %1775 = vmatprep.subr.bf16.mxu0 %v1324
    %1776 = vmatpush1.bf16.msra.mxu0 %v1323
    %1777 = vmatprep.subr.bf16.mxu0 %v1328
    %1778 = vmatpush1.bf16.msra.mxu0 %v1327
    %1779 = vmatprep.subr.bf16.mxu0 %v1332
    %1780 = vmatpush1.bf16.msra.mxu0 %v1331
    %1781 = vmatprep.subr.bf16.mxu0 %v1336
    %1782 = vmatpush1.bf16.msra.mxu0 %v1335
    %1783 = vmatprep.subr.bf16.mxu0 %v1340
    %1784 = vmatpush1.bf16.msra.mxu0 %v1339
    %1785 = vmatprep.subr.bf16.mxu0 %v1344
    %1786 = vmatpush1.bf16.msra.mxu0 %v1343
    %1787 = vmatprep.subr.bf16.mxu0 %v1348
    %1788 = vmatpush1.bf16.msra.mxu0 %v1347
    %1789 = vmatprep.subr.bf16.mxu0 %v1352
    %1790 = vmatpush1.bf16.msra.mxu0 %v1351
    %1791 = vmatprep.subr.bf16.mxu0 %v1356
    %1792 = vmatpush1.bf16.msra.mxu0 %v1355
    %1793 = vmatprep.mubr.bf16.mxu0 %v386
    %1794 = vmatmul.mubr.bf16.gmra.mrb[0].mxu0 %v372
    %v1795 = vpop.f32.mrb[0].mxu0
    %v1796 = vadd.f32 %v1755, %v1795
    %v1797 = vpop.f32.mrb[0].mxu0
    %v1798 = vadd.f32 %v1757, %v1797
    %v1799 = vpop.f32.mrb[0].mxu0
    %v1800 = vpop.f32.mrb[0].mxu0
    %1801 = vdwg.mxu0
    %1802 = vmatprep.subr.bf16.mxu0 %v1360
    %1803 = vmatpush1.bf16.msra.mxu0 %v1359
    %1804 = vmatprep.subr.bf16.mxu0 %v1364
    %1805 = vmatpush1.bf16.msra.mxu0 %v1363
    %1806 = vmatprep.subr.bf16.mxu0 %v1368
    %1807 = vmatpush1.bf16.msra.mxu0 %v1367
    %1808 = vmatprep.subr.bf16.mxu0 %v1372
    %1809 = vmatpush1.bf16.msra.mxu0 %v1371
    %1810 = vmatprep.subr.bf16.mxu0 %v1376
    %1811 = vmatpush1.bf16.msra.mxu0 %v1375
    %1812 = vmatprep.subr.bf16.mxu0 %v1380
    %1813 = vmatpush1.bf16.msra.mxu0 %v1379
    %1814 = vmatprep.subr.bf16.mxu0 %v1384
    %1815 = vmatpush1.bf16.msra.mxu0 %v1383
    %1816 = vmatprep.subr.bf16.mxu0 %v1388
    %1817 = vmatpush1.bf16.msra.mxu0 %v1387
    %1818 = vmatprep.subr.bf16.mxu0 %v1392
    %1819 = vmatpush1.bf16.msra.mxu0 %v1391
    %1820 = vmatprep.subr.bf16.mxu0 %v1396
    %1821 = vmatpush1.bf16.msra.mxu0 %v1395
    %1822 = vmatprep.subr.bf16.mxu0 %v1400
    %1823 = vmatpush1.bf16.msra.mxu0 %v1399
    %1824 = vmatprep.subr.bf16.mxu0 %v1404
    %1825 = vmatpush1.bf16.msra.mxu0 %v1403
    %1826 = vmatprep.subr.bf16.mxu0 %v1408
    %1827 = vmatpush1.bf16.msra.mxu0 %v1407
    %1828 = vmatprep.subr.bf16.mxu0 %v1412
    %1829 = vmatpush1.bf16.msra.mxu0 %v1411
    %1830 = vmatprep.subr.bf16.mxu0 %v1416
    %1831 = vmatpush1.bf16.msra.mxu0 %v1415
    %1832 = vmatprep.subr.bf16.mxu0 %v1420
    %1833 = vmatpush1.bf16.msra.mxu0 %v1419
    %1834 = vmatprep.mubr.bf16.mxu0 %v390
    %1835 = vmatmul.mubr.bf16.gmra.mrb[0].mxu0 %v388
    %v1836 = vpop.f32.mrb[0].mxu0
    %v1837 = vadd.f32 %v1796, %v1836
    %v1838 = vpop.f32.mrb[0].mxu0
    %v1839 = vadd.f32 %v1798, %v1838
    %v1840 = vpop.f32.mrb[0].mxu0
    %v1841 = vpop.f32.mrb[0].mxu0
    %1842 = vdwg.mxu0
    %1843 = vmatprep.subr.bf16.mxu0 %v1170
    %1844 = vmatpush1.bf16.msra.mxu0 %v1169
    %1845 = vmatprep.subr.bf16.mxu0 %v1174
    %1846 = vmatpush1.bf16.msra.mxu0 %v1173
    %1847 = vmatprep.subr.bf16.mxu0 %v1178
    %1848 = vmatpush1.bf16.msra.mxu0 %v1177
    %1849 = vmatprep.subr.bf16.mxu0 %v1182
    %1850 = vmatpush1.bf16.msra.mxu0 %v1181
    %1851 = vmatprep.subr.bf16.mxu0 %v1186
    %1852 = vmatpush1.bf16.msra.mxu0 %v1185
    %1853 = vmatprep.subr.bf16.mxu0 %v1190
    %1854 = vmatpush1.bf16.msra.mxu0 %v1189
    %1855 = vmatprep.subr.bf16.mxu0 %v1194
    %1856 = vmatpush1.bf16.msra.mxu0 %v1193
    %1857 = vmatprep.subr.bf16.mxu0 %v1198
    %1858 = vmatpush1.bf16.msra.mxu0 %v1197
    %1859 = vmatprep.subr.bf16.mxu0 %v1202
    %1860 = vmatpush1.bf16.msra.mxu0 %v1201
    %1861 = vmatprep.subr.bf16.mxu0 %v1206
    %1862 = vmatpush1.bf16.msra.mxu0 %v1205
    %1863 = vmatprep.subr.bf16.mxu0 %v1210
    %1864 = vmatpush1.bf16.msra.mxu0 %v1209
    %1865 = vmatprep.subr.bf16.mxu0 %v1214
    %1866 = vmatpush1.bf16.msra.mxu0 %v1213
    %1867 = vmatprep.subr.bf16.mxu0 %v1218
    %1868 = vmatpush1.bf16.msra.mxu0 %v1217
    %1869 = vmatprep.subr.bf16.mxu0 %v1222
    %1870 = vmatpush1.bf16.msra.mxu0 %v1221
    %1871 = vmatprep.subr.bf16.mxu0 %v1226
    %1872 = vmatpush1.bf16.msra.mxu0 %v1225
    %1873 = vmatprep.subr.bf16.mxu0 %v1230
    %1874 = vmatpush1.bf16.msra.mxu0 %v1229
    %1875 = vmatprep.mubr.bf16.mxu0 %v379
    %1876 = vmatmul.mubr.bf16.gmra.mrb[0].mxu0 %v365
    %v1877 = vpop.f32.mrb[0].mxu0
    %v1878 = vadd.f32 %v332, %v1877
    %v1879 = vpop.f32.mrb[0].mxu0
    %v1880 = vadd.f32 %v336, %v1879
    %v1881 = vpop.f32.mrb[0].mxu0
    %v1882 = vpop.f32.mrb[0].mxu0
    %1883 = vdwg.mxu0
    %1884 = vmatprep.subr.bf16.mxu0 %v1234
    %1885 = vmatpush1.bf16.msra.mxu0 %v1233
    %1886 = vmatprep.subr.bf16.mxu0 %v1238
    %1887 = vmatpush1.bf16.msra.mxu0 %v1237
    %1888 = vmatprep.subr.bf16.mxu0 %v1242
    %1889 = vmatpush1.bf16.msra.mxu0 %v1241
    %1890 = vmatprep.subr.bf16.mxu0 %v1246
    %1891 = vmatpush1.bf16.msra.mxu0 %v1245
    %1892 = vmatprep.subr.bf16.mxu0 %v1250
    %1893 = vmatpush1.bf16.msra.mxu0 %v1249
    %1894 = vmatprep.subr.bf16.mxu0 %v1254
    %1895 = vmatpush1.bf16.msra.mxu0 %v1253
    %1896 = vmatprep.subr.bf16.mxu0 %v1258
    %1897 = vmatpush1.bf16.msra.mxu0 %v1257
    %1898 = vmatprep.subr.bf16.mxu0 %v1262
    %1899 = vmatpush1.bf16.msra.mxu0 %v1261
    %1900 = vmatprep.subr.bf16.mxu0 %v1266
    %1901 = vmatpush1.bf16.msra.mxu0 %v1265
    %1902 = vmatprep.subr.bf16.mxu0 %v1270
    %1903 = vmatpush1.bf16.msra.mxu0 %v1269
    %1904 = vmatprep.subr.bf16.mxu0 %v1274
    %1905 = vmatpush1.bf16.msra.mxu0 %v1273
    %1906 = vmatprep.subr.bf16.mxu0 %v1278
    %1907 = vmatpush1.bf16.msra.mxu0 %v1277
    %1908 = vmatprep.subr.bf16.mxu0 %v1282
    %1909 = vmatpush1.bf16.msra.mxu0 %v1281
    %1910 = vmatprep.subr.bf16.mxu0 %v1286
    %1911 = vmatpush1.bf16.msra.mxu0 %v1285
    %1912 = vmatprep.subr.bf16.mxu0 %v1290
    %1913 = vmatpush1.bf16.msra.mxu0 %v1289
    %1914 = vmatprep.subr.bf16.mxu0 %v1294
    %1915 = vmatpush1.bf16.msra.mxu0 %v1293
    %1916 = vmatprep.mubr.bf16.mxu0 %v389
    %1917 = vmatmul.mubr.bf16.gmra.mrb[0].mxu0 %v387
    %v1918 = vpop.f32.mrb[0].mxu0
    %v1919 = vadd.f32 %v1878, %v1918
    %v1920 = vpop.f32.mrb[0].mxu0
    %v1921 = vadd.f32 %v1880, %v1920
    %v1922 = vpop.f32.mrb[0].mxu0
    %v1923 = vpop.f32.mrb[0].mxu0
    %1924 = vdwg.mxu0
    %1925 = vmatprep.subr.bf16.mxu0 %v1298
    %1926 = vmatpush1.bf16.msra.mxu0 %v1297
    %1927 = vmatprep.subr.bf16.mxu0 %v1302
    %1928 = vmatpush1.bf16.msra.mxu0 %v1301
    %1929 = vmatprep.subr.bf16.mxu0 %v1306
    %1930 = vmatpush1.bf16.msra.mxu0 %v1305
    %1931 = vmatprep.subr.bf16.mxu0 %v1310
    %1932 = vmatpush1.bf16.msra.mxu0 %v1309
    %1933 = vmatprep.subr.bf16.mxu0 %v1314
    %1934 = vmatpush1.bf16.msra.mxu0 %v1313
    %1935 = vmatprep.subr.bf16.mxu0 %v1318
    %1936 = vmatpush1.bf16.msra.mxu0 %v1317
    %1937 = vmatprep.subr.bf16.mxu0 %v1322
    %1938 = vmatpush1.bf16.msra.mxu0 %v1321
    %1939 = vmatprep.subr.bf16.mxu0 %v1326
    %1940 = vmatpush1.bf16.msra.mxu0 %v1325
    %1941 = vmatprep.subr.bf16.mxu0 %v1330
    %1942 = vmatpush1.bf16.msra.mxu0 %v1329
    %1943 = vmatprep.subr.bf16.mxu0 %v1334
    %1944 = vmatpush1.bf16.msra.mxu0 %v1333
    %1945 = vmatprep.subr.bf16.mxu0 %v1338
    %1946 = vmatpush1.bf16.msra.mxu0 %v1337
    %1947 = vmatprep.subr.bf16.mxu0 %v1342
    %1948 = vmatpush1.bf16.msra.mxu0 %v1341
    %1949 = vmatprep.subr.bf16.mxu0 %v1346
    %1950 = vmatpush1.bf16.msra.mxu0 %v1345
    %1951 = vmatprep.subr.bf16.mxu0 %v1350
    %1952 = vmatpush1.bf16.msra.mxu0 %v1349
    %1953 = vmatprep.subr.bf16.mxu0 %v1354
    %1954 = vmatpush1.bf16.msra.mxu0 %v1353
    %1955 = vmatprep.subr.bf16.mxu0 %v1358
    %1956 = vmatpush1.bf16.msra.mxu0 %v1357
    %1957 = vmatprep.mubr.bf16.mxu0 %v386
    %1958 = vmatmul.mubr.bf16.gmra.mrb[0].mxu0 %v372
    %v1959 = vpop.f32.mrb[0].mxu0
    %v1960 = vadd.f32 %v1919, %v1959
    %v1961 = vpop.f32.mrb[0].mxu0
    %v1962 = vadd.f32 %v1921, %v1961
    %v1963 = vpop.f32.mrb[0].mxu0
    %v1964 = vpop.f32.mrb[0].mxu0
    %1965 = vdwg.mxu0
    %1966 = vmatprep.subr.bf16.mxu0 %v1362
    %1967 = vmatpush1.bf16.msra.mxu0 %v1361
    %1968 = vmatprep.subr.bf16.mxu0 %v1366
    %1969 = vmatpush1.bf16.msra.mxu0 %v1365
    %1970 = vmatprep.subr.bf16.mxu0 %v1370
    %1971 = vmatpush1.bf16.msra.mxu0 %v1369
    %1972 = vmatprep.subr.bf16.mxu0 %v1374
    %1973 = vmatpush1.bf16.msra.mxu0 %v1373
    %1974 = vmatprep.subr.bf16.mxu0 %v1378
    %1975 = vmatpush1.bf16.msra.mxu0 %v1377
    %1976 = vmatprep.subr.bf16.mxu0 %v1382
    %1977 = vmatpush1.bf16.msra.mxu0 %v1381
    %1978 = vmatprep.subr.bf16.mxu0 %v1386
    %1979 = vmatpush1.bf16.msra.mxu0 %v1385
    %1980 = vmatprep.subr.bf16.mxu0 %v1390
    %1981 = vmatpush1.bf16.msra.mxu0 %v1389
    %1982 = vmatprep.subr.bf16.mxu0 %v1394
    %1983 = vmatpush1.bf16.msra.mxu0 %v1393
    %1984 = vmatprep.subr.bf16.mxu0 %v1398
    %1985 = vmatpush1.bf16.msra.mxu0 %v1397
    %1986 = vmatprep.subr.bf16.mxu0 %v1402
    %1987 = vmatpush1.bf16.msra.mxu0 %v1401
    %1988 = vmatprep.subr.bf16.mxu0 %v1406
    %1989 = vmatpush1.bf16.msra.mxu0 %v1405
    %1990 = vmatprep.subr.bf16.mxu0 %v1410
    %1991 = vmatpush1.bf16.msra.mxu0 %v1409
    %1992 = vmatprep.subr.bf16.mxu0 %v1414
    %1993 = vmatpush1.bf16.msra.mxu0 %v1413
    %1994 = vmatprep.subr.bf16.mxu0 %v1418
    %1995 = vmatpush1.bf16.msra.mxu0 %v1417
    %1996 = vmatprep.subr.bf16.mxu0 %v1422
    %1997 = vmatpush1.bf16.msra.mxu0 %v1421
    %1998 = vmatprep.mubr.bf16.mxu0 %v390
    %1999 = vmatmul.mubr.bf16.gmra.mrb[0].mxu0 %v388
    %v2000 = vpop.f32.mrb[0].mxu0
    %v2001 = vadd.f32 %v1960, %v2000
    %v2002 = vpop.f32.mrb[0].mxu0
    %v2003 = vadd.f32 %v1962, %v2002
    %v2004 = vpop.f32.mrb[0].mxu0
    %v2005 = vpop.f32.mrb[0].mxu0
    %2006 = vdwg.mxu0
    %v2007 = vmax.f32 %v1837, 0.0
    %v2008 = vmax.f32 %v1839, 0.0
    %v2009 = vmax.f32 %v2001, 0.0
    %v2010 = vmax.f32 %v2003, 0.0
    %v2011 = vpack.c.bf16 %v2007, %v2007
    %v2012 = vpack.c.bf16 %v2008, %v2008
    %v2013 = vpack.c.bf16 %v2009, %v2009
    %v2014 = vpack.c.bf16 %v2010, %v2010
    %v2015 = vld [vmem:[#allocation5] sm:$0xf]
    %v2016 = vld [vmem:[#allocation5 + $0x4] sm:$0xf]
    %v2017 = vld [vmem:[#allocation5 + $0x8] sm:$0xf]
    %v2018 = vld [vmem:[#allocation5 + $0xc] sm:$0xf]
    %v2019 = vld [vmem:[#allocation5 + $0x10] sm:$0xf]
    %v2020 = vld [vmem:[#allocation5 + $0x14] sm:$0xf]
    %v2021 = vld [vmem:[#allocation5 + $0x18] sm:$0xf]
    %v2022 = vld [vmem:[#allocation5 + $0x1c] sm:$0xf]
    %v2023 = vld [vmem:[#allocation5 + $0x20] sm:$0xf]
    %v2024 = vld [vmem:[#allocation5 + $0x24] sm:$0xf]
    %v2025 = vld [vmem:[#allocation5 + $0x28] sm:$0xf]
    %v2026 = vld [vmem:[#allocation5 + $0x2c] sm:$0xf]
    %v2027 = vld [vmem:[#allocation5 + $0x30] sm:$0xf]
    %v2028 = vld [vmem:[#allocation5 + $0x34] sm:$0xf]
    %v2029 = vld [vmem:[#allocation5 + $0x38] sm:$0xf]
    %v2030 = vld [vmem:[#allocation5 + $0x3c] sm:$0xf]
    %v2031 = vld [vmem:[#allocation5 + $0x40] sm:$0xf]
    %v2032 = vld [vmem:[#allocation5 + $0x44] sm:$0xf]
    %v2033 = vld [vmem:[#allocation5 + $0x48] sm:$0xf]
    %v2034 = vld [vmem:[#allocation5 + $0x4c] sm:$0xf]
    %v2035 = vld [vmem:[#allocation5 + $0x50] sm:$0xf]
    %v2036 = vld [vmem:[#allocation5 + $0x54] sm:$0xf]
    %v2037 = vld [vmem:[#allocation5 + $0x58] sm:$0xf]
    %v2038 = vld [vmem:[#allocation5 + $0x5c] sm:$0xf]
    %v2039 = vld [vmem:[#allocation5 + $0x60] sm:$0xf]
    %v2040 = vld [vmem:[#allocation5 + $0x64] sm:$0xf]
    %v2041 = vld [vmem:[#allocation5 + $0x68] sm:$0xf]
    %v2042 = vld [vmem:[#allocation5 + $0x6c] sm:$0xf]
    %v2043 = vld [vmem:[#allocation5 + $0x70] sm:$0xf]
    %v2044 = vld [vmem:[#allocation5 + $0x74] sm:$0xf]
    %v2045 = vld [vmem:[#allocation5 + $0x78] sm:$0xf]
    %v2046 = vld [vmem:[#allocation5 + $0x7c] sm:$0xf]
    %v2047 = vld [vmem:[#allocation5 + $0x80] sm:$0xf]
    %v2048 = vld [vmem:[#allocation5 + $0x84] sm:$0xf]
    %v2049 = vld [vmem:[#allocation5 + $0x88] sm:$0xf]
    %v2050 = vld [vmem:[#allocation5 + $0x8c] sm:$0xf]
    %v2051 = vld [vmem:[#allocation5 + $0x90] sm:$0xf]
    %v2052 = vld [vmem:[#allocation5 + $0x94] sm:$0xf]
    %v2053 = vld [vmem:[#allocation5 + $0x98] sm:$0xf]
    %v2054 = vld [vmem:[#allocation5 + $0x9c] sm:$0xf]
    %v2055 = vld [vmem:[#allocation5 + $0xa0] sm:$0xf]
    %v2056 = vld [vmem:[#allocation5 + $0xa4] sm:$0xf]
    %v2057 = vld [vmem:[#allocation5 + $0xa8] sm:$0xf]
    %v2058 = vld [vmem:[#allocation5 + $0xac] sm:$0xf]
    %v2059 = vld [vmem:[#allocation5 + $0xb0] sm:$0xf]
    %v2060 = vld [vmem:[#allocation5 + $0xb4] sm:$0xf]
    %v2061 = vld [vmem:[#allocation5 + $0xb8] sm:$0xf]
    %v2062 = vld [vmem:[#allocation5 + $0xbc] sm:$0xf]
    %v2063 = vld [vmem:[#allocation5 + $0xc0] sm:$0xf]
    %v2064 = vld [vmem:[#allocation5 + $0xc4] sm:$0xf]
    %v2065 = vld [vmem:[#allocation5 + $0xc8] sm:$0xf]
    %v2066 = vld [vmem:[#allocation5 + $0xcc] sm:$0xf]
    %v2067 = vld [vmem:[#allocation5 + $0xd0] sm:$0xf]
    %v2068 = vld [vmem:[#allocation5 + $0xd4] sm:$0xf]
    %v2069 = vld [vmem:[#allocation5 + $0xd8] sm:$0xf]
    %v2070 = vld [vmem:[#allocation5 + $0xdc] sm:$0xf]
    %v2071 = vld [vmem:[#allocation5 + $0xe0] sm:$0xf]
    %v2072 = vld [vmem:[#allocation5 + $0xe4] sm:$0xf]
    %v2073 = vld [vmem:[#allocation5 + $0xe8] sm:$0xf]
    %v2074 = vld [vmem:[#allocation5 + $0xec] sm:$0xf]
    %v2075 = vld [vmem:[#allocation5 + $0xf0] sm:$0xf]
    %v2076 = vld [vmem:[#allocation5 + $0xf4] sm:$0xf]
    %v2077 = vld [vmem:[#allocation5 + $0xf8] sm:$0xf]
    %v2078 = vld [vmem:[#allocation5 + $0xfc] sm:$0xf]
    %v2079 = vld [vmem:[%s4] sm:$0x1]
    %v2081 = vlaneseq
    %v2082 = vshrl.u32 %v2081, 7
    %v2083 = vsub.s32 0, %v2082
    %v2084 = vrot.slane %v2079, %v2083
    %v2150 = vunpack.c.l.b16 %v2015
    %v2151 = vunpack.c.l.b16 %v2016
    %v2152 = vunpack.c.l.b16 %v2017
    %v2153 = vunpack.c.l.b16 %v2018
    %v2154 = vunpack.c.l.b16 %v2019
    %v2155 = vunpack.c.l.b16 %v2020
    %v2156 = vunpack.c.l.b16 %v2021
    %v2157 = vunpack.c.l.b16 %v2022
    %v2158 = vunpack.c.l.b16 %v2023
    %v2159 = vunpack.c.l.b16 %v2024
    %v2160 = vunpack.c.l.b16 %v2025
    %v2161 = vunpack.c.l.b16 %v2026
    %v2162 = vunpack.c.l.b16 %v2027
    %v2163 = vunpack.c.l.b16 %v2028
    %v2164 = vunpack.c.l.b16 %v2029
    %v2165 = vunpack.c.l.b16 %v2030
    %v2166 = vunpack.c.l.b16 %v2031
    %v2167 = vunpack.c.l.b16 %v2032
    %v2168 = vunpack.c.l.b16 %v2033
    %v2169 = vunpack.c.l.b16 %v2034
    %v2170 = vunpack.c.l.b16 %v2035
    %v2171 = vunpack.c.l.b16 %v2036
    %v2172 = vunpack.c.l.b16 %v2037
    %v2173 = vunpack.c.l.b16 %v2038
    %v2174 = vunpack.c.l.b16 %v2039
    %v2175 = vunpack.c.l.b16 %v2040
    %v2176 = vunpack.c.l.b16 %v2041
    %v2177 = vunpack.c.l.b16 %v2042
    %v2178 = vunpack.c.l.b16 %v2043
    %v2179 = vunpack.c.l.b16 %v2044
    %v2180 = vunpack.c.l.b16 %v2045
    %v2181 = vunpack.c.l.b16 %v2046
    %v2182 = vunpack.c.l.b16 %v2047
    %v2183 = vunpack.c.l.b16 %v2048
    %v2184 = vunpack.c.l.b16 %v2049
    %v2185 = vunpack.c.l.b16 %v2050
    %v2186 = vunpack.c.l.b16 %v2051
    %v2187 = vunpack.c.l.b16 %v2052
    %v2188 = vunpack.c.l.b16 %v2053
    %v2189 = vunpack.c.l.b16 %v2054
    %v2190 = vunpack.c.l.b16 %v2055
    %v2191 = vunpack.c.l.b16 %v2056
    %v2192 = vunpack.c.l.b16 %v2057
    %v2193 = vunpack.c.l.b16 %v2058
    %v2194 = vunpack.c.l.b16 %v2059
    %v2195 = vunpack.c.l.b16 %v2060
    %v2196 = vunpack.c.l.b16 %v2061
    %v2197 = vunpack.c.l.b16 %v2062
    %v2198 = vunpack.c.l.b16 %v2063
    %v2199 = vunpack.c.l.b16 %v2064
    %v2200 = vunpack.c.l.b16 %v2065
    %v2201 = vunpack.c.l.b16 %v2066
    %v2202 = vunpack.c.l.b16 %v2067
    %v2203 = vunpack.c.l.b16 %v2068
    %v2204 = vunpack.c.l.b16 %v2069
    %v2205 = vunpack.c.l.b16 %v2070
    %v2206 = vunpack.c.l.b16 %v2071
    %v2207 = vunpack.c.l.b16 %v2072
    %v2208 = vunpack.c.l.b16 %v2073
    %v2209 = vunpack.c.l.b16 %v2074
    %v2210 = vunpack.c.l.b16 %v2075
    %v2211 = vunpack.c.l.b16 %v2076
    %v2212 = vunpack.c.l.b16 %v2077
    %v2213 = vunpack.c.l.b16 %v2078
    %v2214 = vpack.c.b16 %v2151, %v2150
    %v2215 = vpack.c.b16 %v2153, %v2152
    %v2216 = vpack.c.b16 %v2155, %v2154
    %v2217 = vpack.c.b16 %v2157, %v2156
    %v2218 = vpack.c.b16 %v2159, %v2158
    %v2219 = vpack.c.b16 %v2161, %v2160
    %v2220 = vpack.c.b16 %v2163, %v2162
    %v2221 = vpack.c.b16 %v2165, %v2164
    %v2222 = vpack.c.b16 %v2167, %v2166
    %v2223 = vpack.c.b16 %v2169, %v2168
    %v2224 = vpack.c.b16 %v2171, %v2170
    %v2225 = vpack.c.b16 %v2173, %v2172
    %v2226 = vpack.c.b16 %v2175, %v2174
    %v2227 = vpack.c.b16 %v2177, %v2176
    %v2228 = vpack.c.b16 %v2179, %v2178
    %v2229 = vpack.c.b16 %v2181, %v2180
    %v2230 = vpack.c.b16 %v2183, %v2182
    %v2231 = vpack.c.b16 %v2185, %v2184
    %v2232 = vpack.c.b16 %v2187, %v2186
    %v2233 = vpack.c.b16 %v2189, %v2188
    %v2234 = vpack.c.b16 %v2191, %v2190
    %v2235 = vpack.c.b16 %v2193, %v2192
    %v2236 = vpack.c.b16 %v2195, %v2194
    %v2237 = vpack.c.b16 %v2197, %v2196
    %v2238 = vpack.c.b16 %v2199, %v2198
    %v2239 = vpack.c.b16 %v2201, %v2200
    %v2240 = vpack.c.b16 %v2203, %v2202
    %v2241 = vpack.c.b16 %v2205, %v2204
    %v2242 = vpack.c.b16 %v2207, %v2206
    %v2243 = vpack.c.b16 %v2209, %v2208
    %v2244 = vpack.c.b16 %v2211, %v2210
    %v2245 = vpack.c.b16 %v2213, %v2212
    %2278 = vmatprep.subr.bf16.mxu0 0
    %2279 = vmatpush1.bf16.msra.mxu0 %v2214
    %2280 = vmatprep.subr.bf16.mxu0 0
    %2281 = vmatpush1.bf16.msra.mxu0 %v2215
    %2282 = vmatprep.subr.bf16.mxu0 0
    %2283 = vmatpush1.bf16.msra.mxu0 %v2216
    %2284 = vmatprep.subr.bf16.mxu0 0
    %2285 = vmatpush1.bf16.msra.mxu0 %v2217
    %2286 = vmatprep.subr.bf16.mxu0 0
    %2287 = vmatpush1.bf16.msra.mxu0 %v2218
    %2288 = vmatprep.subr.bf16.mxu0 0
    %2289 = vmatpush1.bf16.msra.mxu0 %v2219
    %2290 = vmatprep.subr.bf16.mxu0 0
    %2291 = vmatpush1.bf16.msra.mxu0 %v2220
    %2292 = vmatprep.subr.bf16.mxu0 0
    %2293 = vmatpush1.bf16.msra.mxu0 %v2221
    %2294 = vmatprep.subr.bf16.mxu0 0
    %2295 = vmatpush1.bf16.msra.mxu0 %v2222
    %2296 = vmatprep.subr.bf16.mxu0 0
    %2297 = vmatpush1.bf16.msra.mxu0 %v2223
    %2298 = vmatprep.subr.bf16.mxu0 0
    %2299 = vmatpush1.bf16.msra.mxu0 %v2224
    %2300 = vmatprep.subr.bf16.mxu0 0
    %2301 = vmatpush1.bf16.msra.mxu0 %v2225
    %2302 = vmatprep.subr.bf16.mxu0 0
    %2303 = vmatpush1.bf16.msra.mxu0 %v2226
    %2304 = vmatprep.subr.bf16.mxu0 0
    %2305 = vmatpush1.bf16.msra.mxu0 %v2227
    %2306 = vmatprep.subr.bf16.mxu0 0
    %2307 = vmatpush1.bf16.msra.mxu0 %v2228
    %2308 = vmatprep.subr.bf16.mxu0 0
    %2309 = vmatpush1.bf16.msra.mxu0 %v2229
    %2310 = vmatprep.mubr.bf16.mxu0 %v2012
    %2311 = vmatmul.mubr.bf16.gmra.mrb[0].mxu0 %v2011
    %v2312 = vpop.f32.mrb[0].mxu0
    %v2313 = vadd.f32 %v2084, %v2312
    %v2314 = vpop.f32.mrb[0].mxu0
    %v2315 = vpop.f32.mrb[0].mxu0
    %v2316 = vpop.f32.mrb[0].mxu0
    %2317 = vdwg.mxu0
    %2318 = vmatprep.subr.bf16.mxu0 0
    %2319 = vmatpush1.bf16.msra.mxu0 %v2230
    %2320 = vmatprep.subr.bf16.mxu0 0
    %2321 = vmatpush1.bf16.msra.mxu0 %v2231
    %2322 = vmatprep.subr.bf16.mxu0 0
    %2323 = vmatpush1.bf16.msra.mxu0 %v2232
    %2324 = vmatprep.subr.bf16.mxu0 0
    %2325 = vmatpush1.bf16.msra.mxu0 %v2233
    %2326 = vmatprep.subr.bf16.mxu0 0
    %2327 = vmatpush1.bf16.msra.mxu0 %v2234
    %2328 = vmatprep.subr.bf16.mxu0 0
    %2329 = vmatpush1.bf16.msra.mxu0 %v2235
    %2330 = vmatprep.subr.bf16.mxu0 0
    %2331 = vmatpush1.bf16.msra.mxu0 %v2236
    %2332 = vmatprep.subr.bf16.mxu0 0
    %2333 = vmatpush1.bf16.msra.mxu0 %v2237
    %2334 = vmatprep.subr.bf16.mxu0 0
    %2335 = vmatpush1.bf16.msra.mxu0 %v2238
    %2336 = vmatprep.subr.bf16.mxu0 0
    %2337 = vmatpush1.bf16.msra.mxu0 %v2239
    %2338 = vmatprep.subr.bf16.mxu0 0
    %2339 = vmatpush1.bf16.msra.mxu0 %v2240
    %2340 = vmatprep.subr.bf16.mxu0 0
    %2341 = vmatpush1.bf16.msra.mxu0 %v2241
    %2342 = vmatprep.subr.bf16.mxu0 0
    %2343 = vmatpush1.bf16.msra.mxu0 %v2242
    %2344 = vmatprep.subr.bf16.mxu0 0
    %2345 = vmatpush1.bf16.msra.mxu0 %v2243
    %2346 = vmatprep.subr.bf16.mxu0 0
    %2347 = vmatpush1.bf16.msra.mxu0 %v2244
    %2348 = vmatprep.subr.bf16.mxu0 0
    %2349 = vmatpush1.bf16.msra.mxu0 %v2245
    %2350 = vmatprep.mubr.bf16.mxu0 %v2014
    %2351 = vmatmul.mubr.bf16.gmra.mrb[0].mxu0 %v2013
    %v2352 = vpop.f32.mrb[0].mxu0
    %v2353 = vadd.f32 %v2313, %v2352
    %v2354 = vpop.f32.mrb[0].mxu0
    %v2355 = vpop.f32.mrb[0].mxu0
    %v2356 = vpop.f32.mrb[0].mxu0
    %2357 = vdwg.mxu0
    %v2358 = vmax.f32 %v2353, 0.0
    %v2359 = vpack.c.bf16 %v2358, %v2358
    %v2360 = vld [vmem:[%s5] sm:$0xf]
    %v2361 = vld [vmem:[%s5 + $0x4] sm:$0xf]
    %v2362 = vld [vmem:[%s5 + $0x8] sm:$0xf]
    %v2363 = vld [vmem:[%s5 + $0xc] sm:$0xf]
    %v2364 = vld [vmem:[%s5 + $0x10] sm:$0xf]
    %v2365 = vld [vmem:[%s5 + $0x14] sm:$0xf]
    %v2366 = vld [vmem:[%s5 + $0x18] sm:$0xf]
    %v2367 = vld [vmem:[%s5 + $0x1c] sm:$0xf]
    %v2368 = vld [vmem:[%s5 + $0x20] sm:$0xf]
    %v2369 = vld [vmem:[%s5 + $0x24] sm:$0xf]
    %v2370 = vld [vmem:[%s5 + $0x28] sm:$0xf]
    %v2371 = vld [vmem:[%s5 + $0x2c] sm:$0xf]
    %v2372 = vld [vmem:[%s5 + $0x30] sm:$0xf]
    %v2373 = vld [vmem:[%s5 + $0x34] sm:$0xf]
    %v2374 = vld [vmem:[%s5 + $0x38] sm:$0xf]
    %v2375 = vld [vmem:[%s5 + $0x3c] sm:$0xf]
    %v2376 = vld [vmem:[%s6] sm:$0x1]
    %v2377 = vld [vmem:[%s7] sm:$0xf]
    %v2378 = vld [vmem:[%s7 + $0x4] sm:$0xf]
    %v2379 = vld [vmem:[%s7 + $0x8] sm:$0xf]
    %v2380 = vld [vmem:[%s7 + $0xc] sm:$0xf]
    %v2381 = vld [vmem:[%s7 + $0x10] sm:$0xf]
    %v2382 = vld [vmem:[%s7 + $0x14] sm:$0xf]
    %v2383 = vld [vmem:[%s7 + $0x18] sm:$0xf]
    %v2384 = vld [vmem:[%s7 + $0x1c] sm:$0xf]
    %v2385 = vld [vmem:[%s7 + $0x20] sm:$0xf]
    %v2386 = vld [vmem:[%s7 + $0x24] sm:$0xf]
    %v2387 = vld [vmem:[%s7 + $0x28] sm:$0xf]
    %v2388 = vld [vmem:[%s7 + $0x2c] sm:$0xf]
    %v2389 = vld [vmem:[%s8] sm:$0x1]
    %v2391 = vlaneseq
    %v2392 = vshrl.u32 %v2391, 7
    %v2393 = vsub.s32 0, %v2392
    %v2394 = vrot.slane %v2376, %v2393
    %v2412 = vunpack.c.l.b16 %v2360
    %v2413 = vunpack.c.l.b16 %v2361
    %v2414 = vunpack.c.l.b16 %v2362
    %v2415 = vunpack.c.l.b16 %v2363
    %v2416 = vunpack.c.l.b16 %v2364
    %v2417 = vunpack.c.l.b16 %v2365
    %v2418 = vunpack.c.l.b16 %v2366
    %v2419 = vunpack.c.l.b16 %v2367
    %v2420 = vunpack.c.l.b16 %v2368
    %v2421 = vunpack.c.l.b16 %v2369
    %v2422 = vunpack.c.l.b16 %v2370
    %v2423 = vunpack.c.l.b16 %v2371
    %v2424 = vunpack.c.l.b16 %v2372
    %v2425 = vunpack.c.l.b16 %v2373
    %v2426 = vunpack.c.l.b16 %v2374
    %v2427 = vunpack.c.l.b16 %v2375
    %v2428 = vpack.c.b16 %v2413, %v2412
    %v2429 = vpack.c.b16 %v2415, %v2414
    %v2430 = vpack.c.b16 %v2417, %v2416
    %v2431 = vpack.c.b16 %v2419, %v2418
    %v2432 = vpack.c.b16 %v2421, %v2420
    %v2433 = vpack.c.b16 %v2423, %v2422
    %v2434 = vpack.c.b16 %v2425, %v2424
    %v2435 = vpack.c.b16 %v2427, %v2426
    %2444 = vmatprep.subr.bf16.mxu0 0
    %2445 = vmatpush1.bf16.msra.mxu0 %v2428
    %2446 = vmatprep.subr.bf16.mxu0 0
    %2447 = vmatpush1.bf16.msra.mxu0 %v2429
    %2448 = vmatprep.subr.bf16.mxu0 0
    %2449 = vmatpush1.bf16.msra.mxu0 %v2430
    %2450 = vmatprep.subr.bf16.mxu0 0
    %2451 = vmatpush1.bf16.msra.mxu0 %v2431
    %2452 = vmatprep.subr.bf16.mxu0 0
    %2453 = vmatpush1.bf16.msra.mxu0 %v2432
    %2454 = vmatprep.subr.bf16.mxu0 0
    %2455 = vmatpush1.bf16.msra.mxu0 %v2433
    %2456 = vmatprep.subr.bf16.mxu0 0
    %2457 = vmatpush1.bf16.msra.mxu0 %v2434
    %2458 = vmatprep.subr.bf16.mxu0 0
    %2459 = vmatpush1.bf16.msra.mxu0 %v2435
    %2460 = vmatprep.subr.bf16.mxu0 0
    %2461 = vmatpush1.bf16.msra.mxu0 0
    %2462 = vmatprep.subr.bf16.mxu0 0
    %2463 = vmatpush1.bf16.msra.mxu0 0
    %2464 = vmatprep.subr.bf16.mxu0 0
    %2465 = vmatpush1.bf16.msra.mxu0 0
    %2466 = vmatprep.subr.bf16.mxu0 0
    %2467 = vmatpush1.bf16.msra.mxu0 0
    %2468 = vmatprep.subr.bf16.mxu0 0
    %2469 = vmatpush1.bf16.msra.mxu0 0
    %2470 = vmatprep.subr.bf16.mxu0 0
    %2471 = vmatpush1.bf16.msra.mxu0 0
    %2472 = vmatprep.subr.bf16.mxu0 0
    %2473 = vmatpush1.bf16.msra.mxu0 0
    %2474 = vmatprep.subr.bf16.mxu0 0
    %2475 = vmatpush1.bf16.msra.mxu0 0
    %2476 = vmatprep.mubr.bf16.mxu0 0
    %2477 = vmatmul.mubr.bf16.gmra.mrb[0].mxu0 %v2359
    %v2478 = vpop.f32.mrb[0].mxu0
    %v2479 = vadd.f32 %v2394, %v2478
    %v2480 = vpop.f32.mrb[0].mxu0
    %v2481 = vpop.f32.mrb[0].mxu0
    %v2482 = vpop.f32.mrb[0].mxu0
    %2483 = vdwg.mxu0
    %v2484 = vmax.f32 %v2479, 0.0
    %v2485 = vpack.c.bf16 %v2484, %v2484
    %v2487 = vlaneseq
    %v2488 = vshrl.u32 %v2487, 7
    %v2489 = vsub.s32 0, %v2488
    %v2490 = vrot.slane %v2389, %v2489
    %v2504 = vunpack.c.l.b16 %v2377
    %v2505 = vunpack.c.l.b16 %v2378
    %v2506 = vunpack.c.l.b16 %v2379
    %v2507 = vunpack.c.l.b16 %v2380
    %v2508 = vunpack.c.l.b16 %v2381
    %v2509 = vunpack.c.l.b16 %v2382
    %v2510 = vunpack.c.l.b16 %v2383
    %v2511 = vunpack.c.l.b16 %v2384
    %v2512 = vunpack.c.l.b16 %v2385
    %v2513 = vunpack.c.l.b16 %v2386
    %v2514 = vunpack.c.l.b16 %v2387
    %v2515 = vunpack.c.l.b16 %v2388
    %v2516 = vpack.c.b16 %v2505, %v2504
    %v2517 = vpack.c.b16 %v2507, %v2506
    %v2518 = vpack.c.b16 %v2509, %v2508
    %v2519 = vpack.c.b16 %v2511, %v2510
    %v2520 = vpack.c.b16 %v2513, %v2512
    %v2521 = vpack.c.b16 %v2515, %v2514
    %vm2528 = vcmask 785408
    %v2530 = vsel %vm2528, %v2485, 0
    %2532 = vmatprep.subr.bf16.mxu0 0
    %2533 = vmatpush1.bf16.msra.mxu0 %v2516
    %2534 = vmatprep.subr.bf16.mxu0 0
    %2535 = vmatpush1.bf16.msra.mxu0 %v2517
    %2536 = vmatprep.subr.bf16.mxu0 0
    %2537 = vmatpush1.bf16.msra.mxu0 %v2518
    %2538 = vmatprep.subr.bf16.mxu0 0
    %2539 = vmatpush1.bf16.msra.mxu0 %v2519
    %2540 = vmatprep.subr.bf16.mxu0 0
    %2541 = vmatpush1.bf16.msra.mxu0 %v2520
    %2542 = vmatprep.subr.bf16.mxu0 0
    %2543 = vmatpush1.bf16.msra.mxu0 %v2521
    %2544 = vmatprep.subr.bf16.mxu0 0
    %2545 = vmatpush1.bf16.msra.mxu0 0
    %2546 = vmatprep.subr.bf16.mxu0 0
    %2547 = vmatpush1.bf16.msra.mxu0 0
    %2548 = vmatprep.subr.bf16.mxu0 0
    %2549 = vmatpush1.bf16.msra.mxu0 0
    %2550 = vmatprep.subr.bf16.mxu0 0
    %2551 = vmatpush1.bf16.msra.mxu0 0
    %2552 = vmatprep.subr.bf16.mxu0 0
    %2553 = vmatpush1.bf16.msra.mxu0 0
    %2554 = vmatprep.subr.bf16.mxu0 0
    %2555 = vmatpush1.bf16.msra.mxu0 0
    %2556 = vmatprep.subr.bf16.mxu0 0
    %2557 = vmatpush1.bf16.msra.mxu0 0
    %2558 = vmatprep.subr.bf16.mxu0 0
    %2559 = vmatpush1.bf16.msra.mxu0 0
    %2560 = vmatprep.subr.bf16.mxu0 0
    %2561 = vmatpush1.bf16.msra.mxu0 0
    %2562 = vmatprep.subr.bf16.mxu0 0
    %2563 = vmatpush1.bf16.msra.mxu0 0
    %2564 = vmatprep.mubr.bf16.mxu0 0
    %2565 = vmatmul.mubr.bf16.gmra.mrb[0].mxu0 %v2530
    %v2566 = vpop.f32.mrb[0].mxu0
    %v2567 = vadd.f32 %v2490, %v2566
    %v2568 = vpop.f32.mrb[0].mxu0
    %v2569 = vpop.f32.mrb[0].mxu0
    %v2570 = vpop.f32.mrb[0].mxu0
    %2571 = vdwg.mxu0
    %vm2572 = vcmask 140288
    %2573 = vst.msk [vmem:[#allocation7] sm:$0x3] %vm2572, %v2567
    // Predicated region
    $region46: #{tpu_custom_call.1} parent=1 // pred_check
      _
    $region47: #{tpu_custom_call.1} parent=1 // pred_check_branch
      %2575 = sbr.rel (0) target = $region49
    $region48: #{tpu_custom_call.1} parent=1 // pred_region
      %s2577 = ssub.s32 32, 32
      %2578 = vsyncadd [#allocation4], %s2577
      %s2580 = sshll.u32 [#allocation7], 4
      %s2581 = int_to_ptr.vmem [resolvable:$true] %s2580
      %2583 = dma.vmem_to_hbm [thread:$0]  %s2581, 32, %s9, [#allocation4]
    $region49: #{tpu_custom_call.1} parent=1 // pred_fallthru
      _
    // Predicated region
    $region50: #{tpu_custom_call.1} parent=1 // pred_check
      _
    $region51: #{tpu_custom_call.1} parent=1 // pred_check_branch
      %2585 = sbr.rel (0) target = $region53
    $region52: #{tpu_custom_call.1} parent=1 // pred_region
      %2586 = dma.done [#allocation4], 32
    $region53: #{tpu_custom_call.1} parent=1 // pred_fallthru
      _
    %2587 = vsyncpa [#allocation3], 1
    %2588 = vsyncpa [#allocation6], 1
    %2589 = vsyncpa [#allocation4], 1

</llo_original>
